<compile_context>
chip_gen: v6e
topology: v6e:2x2x1
jax: 0.10.0
libtpu: 0.0.40
codegen_flags: <defaults>
</compile_context>

<pallas_src>
import functools

import jax
import jax.numpy as jnp
from jax.experimental import pallas as pl
from jax.experimental.pallas import tpu as pltpu


def _round_up(a, b):
    return -(-a // b) * b


def moe_ffn_kernel(ids_ref, cnt_ref, x_ref, wgu_ref, wd_ref, comb_ref, o_ref,
                   acc_ref, *, inter, n_e, resident):
    """Grid = (token tile i, expert slot e). The f32 scratch accumulator is resident across
    the expert-slot axis:  acc[t] = sum_e combine[t, ids[i,e]] * FFN_{ids[i,e]}(x[t])."""
    i = pl.program_id(0)
    e = pl.program_id(1)

    @pl.when(e == 0)
    def _():
        acc_ref[...] = jnp.zeros_like(acc_ref)

    # Only the first cnt[i] slots are distinct active experts for this tile; trailing slots
    # repeat the last active id (so the streaming path's weight DMA is elided) and are
    # skipped here (skips both compute and, in the streaming path, the re-fetch).
    @pl.when(e < cnt_ref[i])
    def _():
        if resident:
            eid = ids_ref[i * n_e + e]
            wgu = wgu_ref[eid]                  # (H, 2I) bf16, read from resident VMEM
            wdn = wd_ref[eid]                   # (I, H)  bf16
        else:
            wgu = wgu_ref[...]                  # per-expert block streamed via BlockSpec
            wdn = wd_ref[...]
        x = x_ref[...]                                               # (TM, H) bf16
        # Fused gate/up projection: one MXU op, f32 accumulation.
        gu = jnp.dot(x, wgu, preferred_element_type=jnp.float32)    # (TM, 2I) f32
        g = gu[:, :inter]                                           # lane-aligned split
        u = gu[:, inter:]
        h = (g * jax.nn.sigmoid(g)) * u                             # SwiGLU, f32 VPU/EUP
        y = jnp.dot(h.astype(jnp.bfloat16), wdn,
                    preferred_element_type=jnp.float32)             # (TM, H) f32
        acc_ref[...] += comb_ref[...] * y                           # comb: (TM, 1) f32

    @pl.when(e == n_e - 1)
    def _():
        o_ref[...] = acc_ref[...].astype(o_ref.dtype)               # bf16 writeback


def moe_ffn_pallas(ids, cnt, x_bf16, wgu, wd, comb_c, *, tm, resident, vmem_limit_bytes):
    t_pad, hidden = x_bf16.shape
    e_total, _, i2 = wgu.shape
    inter = i2 // 2
    num_tiles = t_pad // tm
    n_e = e_total

    if resident:
        # Constant block index -> weights fetched from HBM once, stay VMEM-resident.
        wgu_spec = pl.BlockSpec((e_total, hidden, i2), lambda i, e, ids, cnt: (0, 0, 0))
        wd_spec = pl.BlockSpec((e_total, inter, hidden), lambda i, e, ids, cnt: (0, 0, 0))
    else:
        # Streamed per-expert weights, indexed through the compacted active-expert list.
        wgu_spec = pl.BlockSpec((pl.Squeezed(), hidden, i2),
                                lambda i, e, ids, cnt: (ids[i * n_e + e], 0, 0))
        wd_spec = pl.BlockSpec((pl.Squeezed(), inter, hidden),
                               lambda i, e, ids, cnt: (ids[i * n_e + e], 0, 0))

    kernel = functools.partial(moe_ffn_kernel, inter=inter, n_e=n_e, resident=resident)
    return pl.pallas_call(
        kernel,
        out_shape=jax.ShapeDtypeStruct((t_pad, hidden), jnp.bfloat16),
        grid_spec=pltpu.PrefetchScalarGridSpec(
            num_scalar_prefetch=2,                    # ids, cnt -> SMEM
            grid=(num_tiles, e_total),                # expert-slot axis innermost (reduction)
            in_specs=[
                # token tile (re-used across the expert axis)
                pl.BlockSpec((tm, hidden), lambda i, e, ids, cnt: (i, 0)),
                wgu_spec,
                wd_spec,
                # compacted routing weight of slot e for this tile: kernel sees (TM, 1)
                pl.BlockSpec((pl.Squeezed(), pl.Squeezed(), tm, 1),
                             lambda i, e, ids, cnt: (i, e, 0, 0)),
            ],
            out_specs=pl.BlockSpec((tm, hidden), lambda i, e, ids, cnt: (i, 0)),
            scratch_shapes=[pltpu.VMEM((tm, hidden), jnp.float32)],   # f32 accumulator
        ),
        compiler_params=pltpu.CompilerParams(
            dimension_semantics=("parallel", "arbitrary"),
            vmem_limit_bytes=int(vmem_limit_bytes),
        ),
    )(ids, cnt, x_bf16, wgu, wd, comb_c)


def moe_gate(x_flat, gate_w, top_k, norm_topk_prob):
    """MoEGate: softmax scoring + top-k + optional renormalization (plain JAX glue —
    top-k routing has no clean Pallas equivalent)."""
    logits = x_flat @ gate_w.T
    scores = jax.nn.softmax(logits, axis=-1)
    topk_w, topk_idx = jax.lax.top_k(scores, top_k)   # torch uses sorted=False; order-insensitive combine
    if top_k > 1 and norm_topk_prob:
        topk_w = topk_w / (jnp.sum(topk_w, axis=-1, keepdims=True) + 1e-20)
    return topk_idx, topk_w


def _vmem_capacity_bytes():
    try:
        cap = int(getattr(pltpu.get_tpu_info(), "vmem_capacity_bytes"))
        if cap > 0:
            return cap
    except Exception:
        pass
    return 64 * 1024 * 1024     # conservative fallback (v7x per-TC)


def moe_feed_forward(x, gate_w, wg, wu, wd, n_routed, n_shared, top_k,
                     norm_topk_prob=True, tm=256, force_stream=False):
    B, S, H = x.shape
    x_flat = x.reshape(-1, H)
    T = x_flat.shape[0]
    e_total = n_routed + n_shared

    # ---- routing (MoEGate, eval path: aux_loss = 0) --------------------------------------
    topk_idx, topk_w = moe_gate(x_flat, gate_w, top_k, norm_topk_prob)
    combine = jnp.sum(jax.nn.one_hot(topk_idx, n_routed, dtype=jnp.float32)
                      * topk_w[..., None], axis=1)                          # (T, n_routed)
    if n_shared > 0:
        combine = jnp.concatenate(
            [combine, jnp.ones((T, n_shared), jnp.float32)], axis=1)        # shared weight 1.0

    # ---- token tile sizing: multiple of 128, keep >= 2 tiles when possible (v7x megacore) -
    tm = max(128, (int(tm) // 128) * 128)
    if T > 128:
        tm = min(tm, max(128, _round_up(T // 2, 128)))
    else:
        tm = 128
    num_tiles = -(-T // tm)
    t_pad = num_tiles * tm
    if t_pad != T:
        x_flat = jnp.pad(x_flat, ((0, t_pad - T), (0, 0)))
        combine = jnp.pad(combine, ((0, t_pad - T), (0, 0)))                # padded tokens: weight 0

    # ---- weights: pad intermediate dim to a 128-lane boundary, fuse [gate|up], bf16 -------
    inter = wg.shape[-1]
    inter_pad = _round_up(inter, 128)
    if inter_pad != inter:
        pad_i = inter_pad - inter
        wg = jnp.pad(wg, ((0, 0), (0, 0), (0, pad_i)))
        wu = jnp.pad(wu, ((0, 0), (0, 0), (0, pad_i)))
        wd = jnp.pad(wd, ((0, 0), (0, pad_i), (0, 0)))
    wgu = jnp.concatenate([wg, wu], axis=-1).astype(jnp.bfloat16)           # (E, H, 2*I_pad)
    wd_b = wd.astype(jnp.bfloat16)                                          # (E, I_pad, H)

    # ---- per-tile compacted active-expert schedule (flat 1-D SMEM tables) ------------------
    comb_tiled = combine.reshape(num_tiles, tm, e_total)
    occ = comb_tiled.max(axis=1) > 0.0                                      # (tiles, E)
    cnt = occ.sum(axis=1).astype(jnp.int32)                                 # active experts / tile
    order = jnp.argsort(~occ, axis=1).astype(jnp.int32)                     # active first (stable)
    slot = jnp.arange(e_total, dtype=jnp.int32)[None, :]
    last_active = jnp.take_along_axis(order, jnp.maximum(cnt - 1, 0)[:, None], axis=1)
    ids2d = jnp.where(slot < cnt[:, None], order, last_active)              # repeat id -> DMA elided
    ids = ids2d.reshape(-1)                                                 # (tiles*E,) int32

    comb_et = jnp.transpose(comb_tiled, (0, 2, 1))                          # (tiles, E, tm)
    comb_c = jnp.take_along_axis(comb_et, ids2d[:, :, None], axis=1)        # compacted weights
    comb_c = (comb_c * (slot < cnt[:, None]).astype(jnp.float32)[:, :, None])[..., None]

    # ---- per-generation VMEM budget & weight-residency decision ----------------------------
    cap = _vmem_capacity_bytes()
    vmem_limit = min(cap * 7 // 8, 128 * 1024 * 1024)
    w_resident_bytes = 2 * e_total * (H * 2 * inter_pad + inter_pad * H) * 2   # 2x-buffered bf16
    per_tile_bytes = (2 * tm * H * 2            # x (double-buffered, bf16)
                      + 2 * tm * H * 2          # bf16 out (double-buffered)
                      + tm * H * 4              # f32 accumulator scratch
                      + 2 * tm * 128 * 4        # combine block (lane-padded)
                      + tm * 3 * inter_pad * 4)  # f32 gu/h intermediates
    resident = (not force_stream) and \
        (w_resident_bytes + per_tile_bytes <= (vmem_limit * 3) // 4)

    y_pad = moe_ffn_pallas(ids, cnt, x_flat.astype(jnp.bfloat16), wgu, wd_b, comb_c,
                           tm=tm, resident=resident, vmem_limit_bytes=vmem_limit)
    return y_pad[:T].astype(x.dtype).reshape(B, S, H)


if __name__ == "__main__":
    # Small config consistent with MiniMindConfig defaults (hidden scaled down), sized so the
    # token axis exercises >1 tile.
    B, S, H = 2, 128, 128
    I = 64 * ((int(H * 8 / 3) + 64 - 1) // 64)   # MiniMind intermediate_size rule -> 384
    N_ROUTED, N_SHARED, TOP_K = 4, 1, 2
    E_TOTAL = N_ROUTED + N_SHARED

    key = jax.random.PRNGKey(0)
    k_x, k_g, k_wg, k_wu, k_wd = jax.random.split(key, 5)
    x = jax.random.normal(k_x, (B, S, H), jnp.float32)

    lim_h = 1.0 / (H ** 0.5)
    lim_i = 1.0 / (I ** 0.5)
    gate_w = jax.random.uniform(k_g, (N_ROUTED, H), jnp.float32, -lim_h, lim_h)
    wg = jax.random.uniform(k_wg, (E_TOTAL, H, I), jnp.float32, -lim_h, lim_h)
    wu = jax.random.uniform(k_wu, (E_TOTAL, H, I), jnp.float32, -lim_h, lim_h)
    wd = jax.random.uniform(k_wd, (E_TOTAL, I, H), jnp.float32, -lim_i, lim_i)

    # Pure-JAX reference (same math as the torch eval path: weighted sum of selected routed
    # experts + shared experts), using the same bf16 matmul inputs / f32 accumulation.
    def ffn_ref(xx, g, u, d):
        xb = xx.astype(jnp.bfloat16)
        gg = jnp.dot(xb, g.astype(jnp.bfloat16), preferred_element_type=jnp.float32)
        uu = jnp.dot(xb, u.astype(jnp.bfloat16), preferred_element_type=jnp.float32)
        hh = (gg * jax.nn.sigmoid(gg)) * uu
        return jnp.dot(hh.astype(jnp.bfloat16), d.astype(jnp.bfloat16),
                       preferred_element_type=jnp.float32)

    x_flat = x.reshape(-1, H)
    topk_idx, topk_w = moe_gate(x_flat, gate_w, TOP_K, True)
    combine = jnp.concatenate(
        [jnp.sum(jax.nn.one_hot(topk_idx, N_ROUTED, dtype=jnp.float32) * topk_w[..., None], axis=1),
         jnp.ones((x_flat.shape[0], N_SHARED), jnp.float32)], axis=1)
    ref = jnp.zeros_like(x_flat)
    for e in range(E_TOTAL):
        ref = ref + combine[:, e:e + 1] * ffn_ref(x_flat, wg[e], wu[e], wd[e])
    ref = ref.reshape(B, S, H)

    # Resident-weight path (chosen automatically at this size).
    y = moe_feed_forward(x, gate_w, wg, wu, wd, N_ROUTED, N_SHARED, TOP_K)
    jax.block_until_ready(y)
    assert jnp.allclose(y, ref, atol=3e-2, rtol=3e-2), "mismatch vs reference (resident path)"

    # Streaming fallback path (per-expert weight DMA via compacted active-expert ids).
    y2 = moe_feed_forward(x, gate_w, wg, wu, wd, N_ROUTED, N_SHARED, TOP_K, force_stream=True)
    jax.block_until_ready(y2)
    assert jnp.allclose(y2, ref, atol=3e-2, rtol=3e-2), "mismatch vs reference (streaming path)"

    # TODO(synk): training-mode aux_loss (seq_aux scatter_add bookkeeping), training-mode
    # token replication and dropout are not part of the eval forward output and are not implemented.
    print("KERNEL_OK")
</pallas_src>

<mosaic_0001>
module attributes {stable_mosaic.version = 11 : i64} {
  func.func @moe_ffn_kernel(%arg0: i32, %arg1: i32, %arg2: memref<10xi32, #tpu.memory_space<smem>>, %arg3: memref<2xi32, #tpu.memory_space<smem>>, %arg4: memref<128x128xbf16, #tpu.memory_space<vmem>>, %arg5: memref<5x128x768xbf16, #tpu.memory_space<vmem>>, %arg6: memref<5x384x128xbf16, #tpu.memory_space<vmem>>, %arg7: memref<1x1x128x1xf32, #tpu.memory_space<vmem>>, %arg8: memref<128x128xbf16, #tpu.memory_space<vmem>>, %arg9: memref<128x128xf32, #tpu.memory_space<vmem>>) attributes {dimension_semantics = [#tpu.dimension_semantics<parallel>, #tpu.dimension_semantics<arbitrary>], iteration_bounds = array<i64: 2, 5>, scalar_prefetch = 2 : i64, scratch_operands = 1 : i64, tpu.core_type = #tpu.core_type<tc>, window_params = [{transform_indices = @transform_0, window_bounds = array<i64: 128, 128>}, {pipeline_mode = #tpu.pipeline_mode<synchronous>, transform_indices = @transform_1, window_bounds = array<i64: 5, 128, 768>}, {pipeline_mode = #tpu.pipeline_mode<synchronous>, transform_indices = @transform_2, window_bounds = array<i64: 5, 384, 128>}, {transform_indices = @transform_3, window_bounds = array<i64: 1, 1, 128, 1>}, {transform_indices = @transform_4, window_bounds = array<i64: 128, 128>}]} {
    %c0_i32 = arith.constant 0 : i32
    %0 = arith.cmpi eq, %arg1, %c0_i32 : i32
    %1 = arith.extui %0 : i1 to i32
    %c0_i32_0 = arith.constant 0 : i32
    %2 = arith.cmpi ne, %1, %c0_i32_0 : i32
    scf.if %2 {
      %cst = arith.constant 0.000000e+00 : f32
      %11 = vector.broadcast %cst : f32 to vector<128x128xf32>
      %c0 = arith.constant 0 : index
      %c0_3 = arith.constant 0 : index
      %12 = vector.load %arg9[%c0, %c0_3] : memref<128x128xf32, #tpu.memory_space<vmem>>, vector<128x128xf32>
      tpu.vector_store %arg9[%c0, %c0_3], %11 {strides = array<i32>} : memref<128x128xf32, #tpu.memory_space<vmem>>, vector<128x128xf32>,
    } else {
    }
    %3 = arith.index_cast %arg0 : i32 to index
    %4 = memref.load %arg3[%3] : memref<2xi32, #tpu.memory_space<smem>>
    %5 = arith.cmpi slt, %arg1, %4 : i32
    %6 = arith.extui %5 : i1 to i32
    %c0_i32_1 = arith.constant 0 : i32
    %7 = arith.cmpi ne, %6, %c0_i32_1 : i32
    scf.if %7 {
      %c5_i32 = arith.constant 5 : i32
      %11 = arith.muli %arg0, %c5_i32 : i32
      %12 = arith.addi %11, %arg1 : i32
      %13 = arith.index_cast %12 : i32 to index
      %14 = memref.load %arg2[%13] : memref<10xi32, #tpu.memory_space<smem>>
      %15 = arith.index_cast %14 : i32 to index
      %c0 = arith.constant 0 : index
      %c0_3 = arith.constant 0 : index
      %16 = vector.load %arg5[%15, %c0, %c0_3] : memref<5x128x768xbf16, #tpu.memory_space<vmem>>, vector<1x128x768xbf16>
      %17 = vector.shape_cast %16 : vector<1x128x768xbf16> to vector<128x768xbf16>
      %18 = arith.index_cast %14 : i32 to index
      %c0_4 = arith.constant 0 : index
      %c0_5 = arith.constant 0 : index
      %19 = vector.load %arg6[%18, %c0_4, %c0_5] : memref<5x384x128xbf16, #tpu.memory_space<vmem>>, vector<1x384x128xbf16>
      %20 = vector.shape_cast %19 : vector<1x384x128xbf16> to vector<384x128xbf16>
      %c0_6 = arith.constant 0 : index
      %c0_7 = arith.constant 0 : index
      %21 = vector.load %arg4[%c0_6, %c0_7] : memref<128x128xbf16, #tpu.memory_space<vmem>>, vector<128x128xbf16>
      %cst = arith.constant dense<0.000000e+00> : vector<128x768xf32>
      %22 = tpu.matmul %21, %17, %cst {dimension_numbers = #tpu.dot_dimension_numbers<[1], [0], [0], [1], [0, 0, 1, 1], [], []>} : vector<128x128xbf16>, vector<128x768xbf16>, vector<128x768xf32> -> vector<128x768xf32>
      %23 = vector.extract_strided_slice %22 {offsets = [0, 0], sizes = [128, 384], strides = [1, 1]} : vector<128x768xf32> to vector<128x384xf32>
      %24 = vector.extract_strided_slice %22 {offsets = [0, 384], sizes = [128, 384], strides = [1, 1]} : vector<128x768xf32> to vector<128x384xf32>
      %25 = arith.negf %23 : vector<128x384xf32>
      %26 = math.exp %25 : vector<128x384xf32>
      %cst_8 = arith.constant 1.000000e+00 : f32
      %27 = vector.broadcast %cst_8 : f32 to vector<128x384xf32>
      %28 = arith.addf %27, %26 : vector<128x384xf32>
      %29 = arith.divf %27, %28 : vector<128x384xf32>
      %30 = arith.mulf %23, %29 : vector<128x384xf32>
      %31 = arith.mulf %30, %24 : vector<128x384xf32>
      %32 = arith.truncf %31 : vector<128x384xf32> to vector<128x384xbf16>
      %cst_9 = arith.constant dense<0.000000e+00> : vector<128x128xf32>
      %33 = tpu.matmul %32, %20, %cst_9 {dimension_numbers = #tpu.dot_dimension_numbers<[1], [0], [0], [1], [0, 0, 1, 1], [], []>} : vector<128x384xbf16>, vector<384x128xbf16>, vector<128x128xf32> -> vector<128x128xf32>
      %c0_10 = arith.constant 0 : index
      %c0_11 = arith.constant 0 : index
      %34 = vector.load %arg9[%c0_10, %c0_11] : memref<128x128xf32, #tpu.memory_space<vmem>>, vector<128x128xf32>
      %c0_12 = arith.constant 0 : index
      %c0_13 = arith.constant 0 : index
      %c0_14 = arith.constant 0 : index
      %c0_15 = arith.constant 0 : index
      %35 = vector.load %arg7[%c0_12, %c0_13, %c0_14, %c0_15] : memref<1x1x128x1xf32, #tpu.memory_space<vmem>>, vector<1x1x128x1xf32>
      %36 = vector.shape_cast %35 : vector<1x1x128x1xf32> to vector<128x1xf32>
      %37 = vector.broadcast %36 : vector<128x1xf32> to vector<128x128xf32>
      %38 = arith.mulf %37, %33 : vector<128x128xf32>
      %39 = arith.addf %34, %38 : vector<128x128xf32>
      %c0_16 = arith.constant 0 : index
      %c0_17 = arith.constant 0 : index
      %40 = vector.load %arg9[%c0_16, %c0_17] : memref<128x128xf32, #tpu.memory_space<vmem>>, vector<128x128xf32>
      tpu.vector_store %arg9[%c0_16, %c0_17], %39 {strides = array<i32>} : memref<128x128xf32, #tpu.memory_space<vmem>>, vector<128x128xf32>,
    } else {
    }
    %c4_i32 = arith.constant 4 : i32
    %8 = arith.cmpi eq, %arg1, %c4_i32 : i32
    %9 = arith.extui %8 : i1 to i32
    %c0_i32_2 = arith.constant 0 : i32
    %10 = arith.cmpi ne, %9, %c0_i32_2 : i32
    scf.if %10 {
      %c0 = arith.constant 0 : index
      %c0_3 = arith.constant 0 : index
      %11 = vector.load %arg9[%c0, %c0_3] : memref<128x128xf32, #tpu.memory_space<vmem>>, vector<128x128xf32>
      %12 = arith.truncf %11 : vector<128x128xf32> to vector<128x128xbf16>
      %c0_4 = arith.constant 0 : index
      %c0_5 = arith.constant 0 : index
      %13 = vector.load %arg8[%c0_4, %c0_5] : memref<128x128xbf16, #tpu.memory_space<vmem>>, vector<128x128xbf16>
      tpu.vector_store %arg8[%c0_4, %c0_5], %12 {strides = array<i32>} : memref<128x128xbf16, #tpu.memory_space<vmem>>, vector<128x128xbf16>,
    } else {
    }
    return
  }
  func.func @transform_0(%arg0: i32, %arg1: i32, %arg2: memref<10xi32, #tpu.memory_space<smem>>, %arg3: memref<2xi32, #tpu.memory_space<smem>>) -> (i32, i32) {
    %c0_i32 = arith.constant 0 : i32
    %c0_i32_0 = arith.constant 0 : i32
    return %arg0, %c0_i32 : i32, i32
  }
  func.func @transform_1(%arg0: i32, %arg1: i32, %arg2: memref<10xi32, #tpu.memory_space<smem>>, %arg3: memref<2xi32, #tpu.memory_space<smem>>) -> (i32, i32, i32) {
    %c0_i32 = arith.constant 0 : i32
    %c0_i32_0 = arith.constant 0 : i32
    %c0_i32_1 = arith.constant 0 : i32
    %c0_i32_2 = arith.constant 0 : i32
    return %c0_i32, %c0_i32_0, %c0_i32_1 : i32, i32, i32
  }
  func.func @transform_2(%arg0: i32, %arg1: i32, %arg2: memref<10xi32, #tpu.memory_space<smem>>, %arg3: memref<2xi32, #tpu.memory_space<smem>>) -> (i32, i32, i32) {
    %c0_i32 = arith.constant 0 : i32
    %c0_i32_0 = arith.constant 0 : i32
    %c0_i32_1 = arith.constant 0 : i32
    %c0_i32_2 = arith.constant 0 : i32
    return %c0_i32, %c0_i32_0, %c0_i32_1 : i32, i32, i32
  }
  func.func @transform_3(%arg0: i32, %arg1: i32, %arg2: memref<10xi32, #tpu.memory_space<smem>>, %arg3: memref<2xi32, #tpu.memory_space<smem>>) -> (i32, i32, i32, i32) {
    %c0_i32 = arith.constant 0 : i32
    %c0_i32_0 = arith.constant 0 : i32
    %c0_i32_1 = arith.constant 0 : i32
    return %arg0, %arg1, %c0_i32, %c0_i32_0 : i32, i32, i32, i32
  }
  func.func @transform_4(%arg0: i32, %arg1: i32, %arg2: memref<10xi32, #tpu.memory_space<smem>>, %arg3: memref<2xi32, #tpu.memory_space<smem>>) -> (i32, i32) {
    %c0_i32 = arith.constant 0 : i32
    %c0_i32_0 = arith.constant 0 : i32
    return %arg0, %c0_i32 : i32, i32
  }
}

</mosaic_0001>

<llo_original>
// kernel: tpu_custom_call.1
$region0: #{tpu_custom_call.1}
  #allocation0 [shape = 'u32[]', space=smem, size = 0x4, offset = 0x4, fixed_abs, tag = 'smem constant byte address 0x4 - core index']
  #allocation1 [shape = 'u32[144,128]{1,0:T(1,128)}', space=vmem, size = 0x12000, scoped, tag = 'internal scratch']
  #allocation2 [shape = 'f32[128,128]{1,0:T(8,128)}', space=vmem, size = 0x10000, scoped, tag = 'scratch operand']
  #allocation3 [shape = 's32[1]{0}', space=sflag, size = 0x4, scoped, tag = 'scoped memory for tpu_custom_call.1']
  #allocation4 [shape = 'u8[512]{0}', space=smem, size = 0x200, scoped, tag = 'prefetched SMEM operand 0']
  #allocation5 [shape = 'u8[512]{0}', space=smem, size = 0x200, scoped, tag = 'prefetched SMEM operand 1']
  %s0 = inlined_call_operand.vmem [shape: s32[10], index: 0, kind: input, shape index: {}]
  %s1 = inlined_call_operand.vmem [shape: s32[2], index: 1, kind: input, shape index: {}]
  %s2 = inlined_call_operand.vmem [shape: bf16[256,128], index: 2, kind: input, shape index: {}]
  %s3 = inlined_call_operand.hbm [shape: bf16[5,128,768], index: 3, kind: input, shape index: {}]
  %s4 = inlined_call_operand.vmem [shape: bf16[5,384,128], index: 4, kind: input, shape index: {}]
  %s5 = inlined_call_operand.vmem [shape: f32[2,5,128,1], index: 5, kind: input, shape index: {}]
  %s6 = inlined_call_operand.hbm [shape: bf16[256,128], index: 6, kind: output, shape index: {}]
  %s7 = sld [smem:[#allocation0]]
  $region65: #{tpu_custom_call.1} parent=0
    _
  %s9 = ssub.s32 1, %s7
  %s10 = scalar_select 0, %s9, %s7
  %s11 = sshll.u32 %s0, 4
  %s12 = int_to_ptr.vmem [resolvable:$true] %s11
  %14 = dma.vmem_to_smem %s12, 16, [#allocation4], [#allocation3]
  %s15 = sshll.u32 %s1, 4
  %s16 = int_to_ptr.vmem [resolvable:$true] %s15
  %18 = dma.vmem_to_smem %s16, 16, [#allocation5], [#allocation3]
  %19 = dma.done [#allocation3], 32
  %20 = sfence
  $region1: #{tpu_custom_call.1} parent=0
    #allocation6 [shape = 'u8[983040]{0}', space=vmem, size = 0xf0000, scoped, tag = 'input window, operand 3, single buffered']
    #allocation7 [shape = 's32[2]{0}', space=sflag, size = 0x8, scoped, tag = 'scoped memory for tpu_custom_call.1']
    #allocation8 [shape = 's32[2]{0}', space=sflag, size = 0x8, scoped, tag = 'scoped memory for tpu_custom_call.1']
    #allocation9 [shape = 'u8[65536]{0}', space=vmem, size = 0x10000, scoped, tag = 'output window, operand 0']
    %21 = vsyncpa [#allocation7], 0
    %22 = vsyncpa [#allocation8], 0
    %s23 = scalar_lea.sflag [#allocation8], 1
    %24 = vsyncpa %s23, 0
    loop: start=0, step=1, limit=12
    $region2: #{tpu_custom_call.1} parent=1 // loop_pre_header
      _
    $region3: #{tpu_custom_call.1} parent=1 // loop_header
      %s26 = sphi 0, %s30
      %p27 = scmp.ge.s32.totalorder %s26, 12
      %s33 = sphi 0, %s45
      %s34 = sphi 0, %s41
      %s35 = sphi 0, %s33
      %s36 = sphi 0, %s34
      %s37 = sphi 0, %s35
      %s38 = sphi 0, %s36
      %s48 = sphi 0, %s50
      %s51 = sphi 0, %s48
      %s52 = sphi 0, %s51
      %s68 = sphi 0, %s52
      %s72 = sphi 0, %s72
      %s74 = sphi 0, %s72
      %s75 = sphi 0, %s74
      %s89 = sphi 0, %s75
      %s93 = sphi 0, %s93
      %s95 = sphi 0, %s93
      %s96 = sphi 0, %s95
      %s110 = sphi 0, %s96
      %s118 = sphi 0, %s120
      %s121 = sphi 0, %s118
      %s122 = sphi 0, %s121
      %s138 = sphi 0, %s122
      %s144 = sphi 0, %s146
      %s147 = sphi 0, %s144
      %s148 = sphi 0, %s147
      %s164 = sphi 0, %s148
    $region4: #{tpu_custom_call.1} parent=1 // loop_header_branch
      %29 = sbr.rel (%p27) target = $region8
    $region5: #{tpu_custom_call.1} parent=1 // loop_body
      %s31 = ssub.s32 %s26, 1
      %s32 = ssub.s32 %s26, 2
      %s39 = sadd.s32 1, %s34
      %p40 = scmp.ge.s32.totalorder %s39, 5
      %s41 = scalar_select %p40, 0, %s39
      %s42 = sadd.s32 1, %s33
      %s43 = scalar_select %p40, %s42, %s33
      %p44 = scmp.ge.s32.totalorder %s43, 2
      %s45 = scalar_select %p44, 0, %s43
      %s46 = ssub.s32 %s33, %s45
      %p47 = scmp.eq.s32.totalorder %s46, 0
      %s49 = sadd.s32 %s48, 1
      %s50 = scalar_select %p47, %s48, %s49
      %p53 = pneg %p47
      %p54 = scmp.eq.s32.totalorder %s26, 9
      %p55 = por %p53, %p54
      %p56 = scmp.ne.s32.totalorder %s48, %s51
      %p57 = scmp.eq.s32.totalorder %s26, 0
      %p58 = por %p56, %p57
      %p59 = scmp.ne.s32.totalorder %s48, %s51
      %p60 = scmp.eq.s32.totalorder %s31, 9
      %p61 = por %p59, %p60
      %p62 = scmp.ne.s32.totalorder %s51, %s52
      %p63 = scmp.eq.s32.totalorder %s31, 0
      %p64 = por %p62, %p63
      %p65 = scmp.ne.s32.totalorder %s51, %s52
      %p66 = scmp.eq.s32.totalorder %s32, 9
      %p67 = por %p65, %p66
      %p69 = scmp.ne.s32.totalorder %s52, %s68
      %p70 = scmp.eq.s32.totalorder %s32, 0
      %p71 = por %p69, %p70
      %s73 = sadd.s32 %s72, 1
      %p76 = scmp.eq.s32.totalorder %s26, 9
      %p77 = scmp.ne.s32.totalorder %s72, %s74
      %p78 = scmp.eq.s32.totalorder %s26, 0
      %p79 = por %p77, %p78
      %p80 = scmp.ne.s32.totalorder %s72, %s74
      %p81 = scmp.eq.s32.totalorder %s31, 9
      %p82 = por %p80, %p81
      %p83 = scmp.ne.s32.totalorder %s74, %s75
      %p84 = scmp.eq.s32.totalorder %s31, 0
      %p85 = por %p83, %p84
      %p86 = scmp.ne.s32.totalorder %s74, %s75
      %p87 = scmp.eq.s32.totalorder %s32, 9
      %p88 = por %p86, %p87
      %p90 = scmp.ne.s32.totalorder %s75, %s89
      %p91 = scmp.eq.s32.totalorder %s32, 0
      %p92 = por %p90, %p91
      %s94 = sadd.s32 %s93, 1
      %p97 = scmp.eq.s32.totalorder %s26, 9
      %p98 = scmp.ne.s32.totalorder %s93, %s95
      %p99 = scmp.eq.s32.totalorder %s26, 0
      %p100 = por %p98, %p99
      %p101 = scmp.ne.s32.totalorder %s93, %s95
      %p102 = scmp.eq.s32.totalorder %s31, 9
      %p103 = por %p101, %p102
      %p104 = scmp.ne.s32.totalorder %s95, %s96
      %p105 = scmp.eq.s32.totalorder %s31, 0
      %p106 = por %p104, %p105
      %p107 = scmp.ne.s32.totalorder %s95, %s96
      %p108 = scmp.eq.s32.totalorder %s32, 9
      %p109 = por %p107, %p108
      %p111 = scmp.ne.s32.totalorder %s96, %s110
      %p112 = scmp.eq.s32.totalorder %s32, 0
      %p113 = por %p111, %p112
      %s114 = ssub.s32 %s33, %s45
      %s115 = ssub.s32 %s34, %s41
      %s116 = sor.u32 %s114, %s115
      %p117 = scmp.eq.s32.totalorder %s116, 0
      %s119 = sadd.s32 %s118, 1
      %s120 = scalar_select %p117, %s118, %s119
      %p123 = pneg %p117
      %p124 = scmp.eq.s32.totalorder %s26, 9
      %p125 = por %p123, %p124
      %p126 = scmp.ne.s32.totalorder %s118, %s121
      %p127 = scmp.eq.s32.totalorder %s26, 0
      %p128 = por %p126, %p127
      %p129 = scmp.ne.s32.totalorder %s118, %s121
      %p130 = scmp.eq.s32.totalorder %s31, 9
      %p131 = por %p129, %p130
      %p132 = scmp.ne.s32.totalorder %s121, %s122
      %p133 = scmp.eq.s32.totalorder %s31, 0
      %p134 = por %p132, %p133
      %p135 = scmp.ne.s32.totalorder %s121, %s122
      %p136 = scmp.eq.s32.totalorder %s32, 9
      %p137 = por %p135, %p136
      %p139 = scmp.ne.s32.totalorder %s122, %s138
      %p140 = scmp.eq.s32.totalorder %s32, 0
      %p141 = por %p139, %p140
      %s142 = ssub.s32 %s33, %s45
      %p143 = scmp.eq.s32.totalorder %s142, 0
      %s145 = sadd.s32 %s144, 1
      %s146 = scalar_select %p143, %s144, %s145
      %p149 = pneg %p143
      %p150 = scmp.eq.s32.totalorder %s26, 9
      %p151 = por %p149, %p150
      %p152 = scmp.ne.s32.totalorder %s144, %s147
      %p153 = scmp.eq.s32.totalorder %s26, 0
      %p154 = por %p152, %p153
      %p155 = scmp.ne.s32.totalorder %s144, %s147
      %p156 = scmp.eq.s32.totalorder %s31, 9
      %p157 = por %p155, %p156
      %p158 = scmp.ne.s32.totalorder %s147, %s148
      %p159 = scmp.eq.s32.totalorder %s31, 0
      %p160 = por %p158, %p159
      %p161 = scmp.ne.s32.totalorder %s147, %s148
      %p162 = scmp.eq.s32.totalorder %s32, 9
      %p163 = por %p161, %p162
      %p165 = scmp.ne.s32.totalorder %s148, %s164
      %p166 = scmp.eq.s32.totalorder %s32, 0
      %p167 = por %p165, %p166
      %p168 = scmp.le.s32.totalorder 1, %s26
      %p169 = scmp.lt.s32.totalorder %s26, 11
      %p170 = pnand %p168, %p169
      %p171 = pneg %p170
      // Predicated region
      $region9: #{tpu_custom_call.1} parent=5 // pred_check
        _
      $region10: #{tpu_custom_call.1} parent=5 // pred_check_branch
        %173 = sbr.rel (%p170) target = $region12
      $region11: #{tpu_custom_call.1} parent=5 // pred_region
        %s174 = ssub.s32 %s26, 1
        // Predicated region
        $region13: #{tpu_custom_call.1} parent=11 // pred_check
          %p175 = pneg %p85
        $region14: #{tpu_custom_call.1} parent=11 // pred_check_branch
          %177 = sbr.rel (%p175) target = $region16
        $region15: #{tpu_custom_call.1} parent=11 // pred_region
          %s179 = ssub.s32 30720, 30720
          %180 = vsyncadd [#allocation7], %s179
          %s181 = sshll.u32 [#allocation6], 4
          %s182 = int_to_ptr.vmem [resolvable:$true] %s181
          %187 = dma.hbm_to_vmem [thread:$0]  %s3, 30720, %s182, [#allocation7], 384, 384, 24
        $region16: #{tpu_custom_call.1} parent=11 // pred_fallthru
          _
        // Predicated region
        $region17: #{tpu_custom_call.1} parent=11 // pred_check
          %p188 = pneg %p106
        $region18: #{tpu_custom_call.1} parent=11 // pred_check_branch
          %190 = sbr.rel (%p188) target = $region20
        $region19: #{tpu_custom_call.1} parent=11 // pred_region
          _
        $region20: #{tpu_custom_call.1} parent=11 // pred_fallthru
          _
      $region12: #{tpu_custom_call.1} parent=5 // pred_fallthru
        _
      %p191 = scmp.lt.s32.totalorder %s26, 10
      // Predicated region
      $region21: #{tpu_custom_call.1} parent=5 // pred_check
        %p192 = pneg %p191
      $region22: #{tpu_custom_call.1} parent=5 // pred_check_branch
        %194 = sbr.rel (%p192) target = $region24
      $region23: #{tpu_custom_call.1} parent=5 // pred_region
        // Predicated region
        $region25: #{tpu_custom_call.1} parent=23 // pred_check
          %p195 = pneg %p58
        $region26: #{tpu_custom_call.1} parent=23 // pred_check_branch
          %197 = sbr.rel (%p195) target = $region28
        $region27: #{tpu_custom_call.1} parent=23 // pred_region
          %s198 = smul.u32 16, %s33
          %p199 = scmp.lt.s32.totalorder %s198, 31
          %s200 = scalar_select %p199, %s198, 31
          %s201 = smul.addr %s200, 4
          %s202 = scalar_lea.vmem %s2, %s201
          %s203 = smul.u32 16, %s33
        $region28: #{tpu_custom_call.1} parent=23 // pred_fallthru
          _
        // Predicated region
        $region29: #{tpu_custom_call.1} parent=23 // pred_check
          %p204 = pneg %p128
        $region30: #{tpu_custom_call.1} parent=23 // pred_check_branch
          %206 = sbr.rel (%p204) target = $region32
        $region31: #{tpu_custom_call.1} parent=23 // pred_region
          %p207 = scmp.lt.s32.totalorder %s33, 1
          %s208 = scalar_select %p207, %s33, 1
          %p209 = scmp.lt.s32.totalorder %s34, 4
          %s210 = scalar_select %p209, %s34, 4
          %s211 = smul.addr %s210, 16
          %s212 = smul.addr %s208, 80
          %s213 = sadd.s32 %s211, %s212
          %s214 = smul.addr %s213, 8
          %s215 = scalar_lea.vmem %s5, %s214
        $region32: #{tpu_custom_call.1} parent=23 // pred_fallthru
          _
      $region24: #{tpu_custom_call.1} parent=5 // pred_fallthru
        _
      %p216 = scmp.le.s32.totalorder 1, %s26
      %p217 = scmp.lt.s32.totalorder %s26, 11
      %p218 = pnand %p216, %p217
      %p219 = pneg %p218
      // Predicated region
      $region33: #{tpu_custom_call.1} parent=5 // pred_check
        _
      $region34: #{tpu_custom_call.1} parent=5 // pred_check_branch
        %221 = sbr.rel (%p218) target = $region36
      $region35: #{tpu_custom_call.1} parent=5 // pred_region
        %s222 = ssub.s32 %s26, 1
        // Predicated region
        $region37: #{tpu_custom_call.1} parent=35 // pred_check
          %p223 = pneg %p85
        $region38: #{tpu_custom_call.1} parent=35 // pred_check_branch
          %225 = sbr.rel (%p223) target = $region40
        $region39: #{tpu_custom_call.1} parent=35 // pred_region
          %226 = dma.done [#allocation7], 30720
        $region40: #{tpu_custom_call.1} parent=35 // pred_fallthru
          _
        %s227 = smul.u32 16, %s35
        %p228 = scmp.lt.s32.totalorder %s227, 31
        %s229 = scalar_select %p228, %s227, 31
        %s230 = smul.addr %s229, 4
        %s231 = scalar_lea.vmem %s2, %s230
        %p232 = pneg %p64
        %p233 = pneg %p61
        %p234 = pneg %p85
        %p235 = pneg %p82
        %p236 = pneg %p106
        %p237 = pneg %p103
        %p238 = scmp.lt.s32.totalorder %s35, 1
        %s239 = scalar_select %p238, %s35, 1
        %p240 = scmp.lt.s32.totalorder %s36, 4
        %s241 = scalar_select %p240, %s36, 4
        %s242 = smul.addr %s241, 16
        %s243 = smul.addr %s239, 80
        %s244 = sadd.s32 %s242, %s243
        %s245 = smul.addr %s244, 8
        %s246 = scalar_lea.vmem %s5, %s245
        %p247 = pneg %p134
        %p248 = pneg %p131
        %p249 = pneg %p160
        %p250 = pneg %p157
        %s251 = sand.u32 %s147, 1
        %s252 = scalar_lea.sflag [#allocation8], %s251
        %s253 = sand.u32 %s147, 1
        %s254 = smul.addr %s253, 64
        %s255 = scalar_lea.vmem [#allocation9], %s254
        %s256 = smul.u32 16, %s35
        %p257 = scmp.lt.s32.totalorder %s256, 31
        %s258 = scalar_select %p257, %s256, 31
        %s259 = smul.addr %s258, 4
        %s260 = scalar_lea.vmem %s2, %s259
        %s261 = smul.u32 16, %s35
        %p262 = scmp.lt.s32.totalorder %s35, 1
        %s263 = scalar_select %p262, %s35, 1
        %p264 = scmp.lt.s32.totalorder %s36, 4
        %s265 = scalar_select %p264, %s36, 4
        %s266 = smul.addr %s265, 16
        %s267 = smul.addr %s263, 80
        %s268 = sadd.s32 %s266, %s267
        %s269 = smul.addr %s268, 8
        %s270 = scalar_lea.vmem %s5, %s269
        %s271 = smul.u32 16, %s35
        %p273 = scmp.eq.s32.totalorder %s36, 0
        // Predicated region
        $region41: #{tpu_custom_call.1} parent=35 // pred_check
          %p274 = pneg %p273
        $region42: #{tpu_custom_call.1} parent=35 // pred_check_branch
          %276 = sbr.rel (%p274) target = $region44
        $region43: #{tpu_custom_call.1} parent=35 // pred_region
          %277 = vst [vmem:[#allocation2] sm:$0xff] 0.0
          %278 = vst [vmem:[#allocation2 + $0x8] sm:$0xff] 0.0
          %279 = vst [vmem:[#allocation2 + $0x10] sm:$0xff] 0.0
          %280 = vst [vmem:[#allocation2 + $0x18] sm:$0xff] 0.0
          %281 = vst [vmem:[#allocation2 + $0x20] sm:$0xff] 0.0
          %282 = vst [vmem:[#allocation2 + $0x28] sm:$0xff] 0.0
          %283 = vst [vmem:[#allocation2 + $0x30] sm:$0xff] 0.0
          %284 = vst [vmem:[#allocation2 + $0x38] sm:$0xff] 0.0
          %285 = vst [vmem:[#allocation2 + $0x40] sm:$0xff] 0.0
          %286 = vst [vmem:[#allocation2 + $0x48] sm:$0xff] 0.0
          %287 = vst [vmem:[#allocation2 + $0x50] sm:$0xff] 0.0
          %288 = vst [vmem:[#allocation2 + $0x58] sm:$0xff] 0.0
          %289 = vst [vmem:[#allocation2 + $0x60] sm:$0xff] 0.0
          %290 = vst [vmem:[#allocation2 + $0x68] sm:$0xff] 0.0
          %291 = vst [vmem:[#allocation2 + $0x70] sm:$0xff] 0.0
          %292 = vst [vmem:[#allocation2 + $0x78] sm:$0xff] 0.0
        $region44: #{tpu_custom_call.1} parent=35 // pred_fallthru
          _
        %s293 = sld [smem:[#allocation5 + %s35]]
        %p294 = scmp.lt.s32.totalorder %s36, %s293
        // Predicated region
        $region45: #{tpu_custom_call.1} parent=35 // pred_check
          %p295 = pneg %p294
        $region46: #{tpu_custom_call.1} parent=35 // pred_check_branch
          %297 = sbr.rel (%p295) target = $region48
        $region47: #{tpu_custom_call.1} parent=35 // pred_region
          %s298 = smul.u32 %s35, 5
          %s299 = sadd.s32 %s298, %s36
          %s300 = sld [smem:[#allocation4 + %s299]]
          %s301 = smul.u32 %s300, 96
          %s302 = smul.addr %s301, 4
          %s303 = scalar_lea.vmem [#allocation6], %s302
          %v304 = vld [vmem:[%s303] sm:$0xff]
          %v305 = vld [vmem:[%s303 + $0x8] sm:$0xff]
          %v306 = vld [vmem:[%s303 + $0x10] sm:$0xff]
          %v307 = vld [vmem:[%s303 + $0x18] sm:$0xff]
          %v308 = vld [vmem:[%s303 + $0x20] sm:$0xff]
          %v309 = vld [vmem:[%s303 + $0x28] sm:$0xff]
          %v310 = vld [vmem:[%s303 + $0x30] sm:$0xff]
          %v311 = vld [vmem:[%s303 + $0x38] sm:$0xff]
          %v312 = vld [vmem:[%s303 + $0x40] sm:$0xff]
          %v313 = vld [vmem:[%s303 + $0x48] sm:$0xff]
          %v314 = vld [vmem:[%s303 + $0x50] sm:$0xff]
          %v315 = vld [vmem:[%s303 + $0x58] sm:$0xff]
          %v316 = vld [vmem:[%s303 + $0x60] sm:$0xff]
          %v317 = vld [vmem:[%s303 + $0x68] sm:$0xff]
          %v318 = vld [vmem:[%s303 + $0x70] sm:$0xff]
          %v319 = vld [vmem:[%s303 + $0x78] sm:$0xff]
          %v320 = vld [vmem:[%s303 + $0x80] sm:$0xff]
          %v321 = vld [vmem:[%s303 + $0x88] sm:$0xff]
          %v322 = vld [vmem:[%s303 + $0x90] sm:$0xff]
          %v323 = vld [vmem:[%s303 + $0x98] sm:$0xff]
          %v324 = vld [vmem:[%s303 + $0xa0] sm:$0xff]
          %v325 = vld [vmem:[%s303 + $0xa8] sm:$0xff]
          %v326 = vld [vmem:[%s303 + $0xb0] sm:$0xff]
          %v327 = vld [vmem:[%s303 + $0xb8] sm:$0xff]
          %v328 = vld [vmem:[%s303 + $0xc0] sm:$0xff]
          %v329 = vld [vmem:[%s303 + $0xc8] sm:$0xff]
          %v330 = vld [vmem:[%s303 + $0xd0] sm:$0xff]
          %v331 = vld [vmem:[%s303 + $0xd8] sm:$0xff]
          %v332 = vld [vmem:[%s303 + $0xe0] sm:$0xff]
          %v333 = vld [vmem:[%s303 + $0xe8] sm:$0xff]
          %v334 = vld [vmem:[%s303 + $0xf0] sm:$0xff]
          %v335 = vld [vmem:[%s303 + $0xf8] sm:$0xff]
          %v336 = vld [vmem:[%s303 + $0x100] sm:$0xff]
          %v337 = vld [vmem:[%s303 + $0x108] sm:$0xff]
          %v338 = vld [vmem:[%s303 + $0x110] sm:$0xff]
          %v339 = vld [vmem:[%s303 + $0x118] sm:$0xff]
          %v340 = vld [vmem:[%s303 + $0x120] sm:$0xff]
          %v341 = vld [vmem:[%s303 + $0x128] sm:$0xff]
          %v342 = vld [vmem:[%s303 + $0x130] sm:$0xff]
          %v343 = vld [vmem:[%s303 + $0x138] sm:$0xff]
          %v344 = vld [vmem:[%s303 + $0x140] sm:$0xff]
          %v345 = vld [vmem:[%s303 + $0x148] sm:$0xff]
          %v346 = vld [vmem:[%s303 + $0x150] sm:$0xff]
          %v347 = vld [vmem:[%s303 + $0x158] sm:$0xff]
          %v348 = vld [vmem:[%s303 + $0x160] sm:$0xff]
          %v349 = vld [vmem:[%s303 + $0x168] sm:$0xff]
          %v350 = vld [vmem:[%s303 + $0x170] sm:$0xff]
          %v351 = vld [vmem:[%s303 + $0x178] sm:$0xff]
          %s352 = smul.u32 %s300, 48
          %s353 = smul.addr %s352, 4
          %s354 = scalar_lea.vmem %s4, %s353
          %v355 = vld [vmem:[%s354] sm:$0xf]
          %v356 = vld [vmem:[%s354 + $0x4] sm:$0xf]
          %v357 = vld [vmem:[%s354 + $0x8] sm:$0xf]
          %v358 = vld [vmem:[%s354 + $0xc] sm:$0xf]
          %v359 = vld [vmem:[%s354 + $0x10] sm:$0xf]
          %v360 = vld [vmem:[%s354 + $0x14] sm:$0xf]
          %v361 = vld [vmem:[%s354 + $0x18] sm:$0xf]
          %v362 = vld [vmem:[%s354 + $0x1c] sm:$0xf]
          %v363 = vld [vmem:[%s354 + $0x20] sm:$0xf]
          %v364 = vld [vmem:[%s354 + $0x24] sm:$0xf]
          %v365 = vld [vmem:[%s354 + $0x28] sm:$0xf]
          %v366 = vld [vmem:[%s354 + $0x2c] sm:$0xf]
          %v367 = vld [vmem:[%s354 + $0x30] sm:$0xf]
          %v368 = vld [vmem:[%s354 + $0x34] sm:$0xf]
          %v369 = vld [vmem:[%s354 + $0x38] sm:$0xf]
          %v370 = vld [vmem:[%s354 + $0x3c] sm:$0xf]
          %v371 = vld [vmem:[%s354 + $0x40] sm:$0xf]
          %v372 = vld [vmem:[%s354 + $0x44] sm:$0xf]
          %v373 = vld [vmem:[%s354 + $0x48] sm:$0xf]
          %v374 = vld [vmem:[%s354 + $0x4c] sm:$0xf]
          %v375 = vld [vmem:[%s354 + $0x50] sm:$0xf]
          %v376 = vld [vmem:[%s354 + $0x54] sm:$0xf]
          %v377 = vld [vmem:[%s354 + $0x58] sm:$0xf]
          %v378 = vld [vmem:[%s354 + $0x5c] sm:$0xf]
          %v379 = vld [vmem:[%s354 + $0x60] sm:$0xf]
          %v380 = vld [vmem:[%s354 + $0x64] sm:$0xf]
          %v381 = vld [vmem:[%s354 + $0x68] sm:$0xf]
          %v382 = vld [vmem:[%s354 + $0x6c] sm:$0xf]
          %v383 = vld [vmem:[%s354 + $0x70] sm:$0xf]
          %v384 = vld [vmem:[%s354 + $0x74] sm:$0xf]
          %v385 = vld [vmem:[%s354 + $0x78] sm:$0xf]
          %v386 = vld [vmem:[%s354 + $0x7c] sm:$0xf]
          %v387 = vld [vmem:[%s354 + $0x80] sm:$0xf]
          %v388 = vld [vmem:[%s354 + $0x84] sm:$0xf]
          %v389 = vld [vmem:[%s354 + $0x88] sm:$0xf]
          %v390 = vld [vmem:[%s354 + $0x8c] sm:$0xf]
          %v391 = vld [vmem:[%s354 + $0x90] sm:$0xf]
          %v392 = vld [vmem:[%s354 + $0x94] sm:$0xf]
          %v393 = vld [vmem:[%s354 + $0x98] sm:$0xf]
          %v394 = vld [vmem:[%s354 + $0x9c] sm:$0xf]
          %v395 = vld [vmem:[%s354 + $0xa0] sm:$0xf]
          %v396 = vld [vmem:[%s354 + $0xa4] sm:$0xf]
          %v397 = vld [vmem:[%s354 + $0xa8] sm:$0xf]
          %v398 = vld [vmem:[%s354 + $0xac] sm:$0xf]
          %v399 = vld [vmem:[%s354 + $0xb0] sm:$0xf]
          %v400 = vld [vmem:[%s354 + $0xb4] sm:$0xf]
          %v401 = vld [vmem:[%s354 + $0xb8] sm:$0xf]
          %v402 = vld [vmem:[%s354 + $0xbc] sm:$0xf]
          %v403 = vld [vmem:[%s260] sm:$0xf]
          %v404 = vld [vmem:[%s260 + $0x4] sm:$0xf]
          %v405 = vld [vmem:[%s260 + $0x8] sm:$0xf]
          %v406 = vld [vmem:[%s260 + $0xc] sm:$0xf]
          %v407 = vld [vmem:[%s260 + $0x10] sm:$0xf]
          %v408 = vld [vmem:[%s260 + $0x14] sm:$0xf]
          %v409 = vld [vmem:[%s260 + $0x18] sm:$0xf]
          %v410 = vld [vmem:[%s260 + $0x1c] sm:$0xf]
          %v411 = vld [vmem:[%s260 + $0x20] sm:$0xf]
          %v412 = vld [vmem:[%s260 + $0x24] sm:$0xf]
          %v413 = vld [vmem:[%s260 + $0x28] sm:$0xf]
          %v414 = vld [vmem:[%s260 + $0x2c] sm:$0xf]
          %v415 = vld [vmem:[%s260 + $0x30] sm:$0xf]
          %v416 = vld [vmem:[%s260 + $0x34] sm:$0xf]
          %v417 = vld [vmem:[%s260 + $0x38] sm:$0xf]
          %v418 = vld [vmem:[%s260 + $0x3c] sm:$0xf]
          %v435 = vunpack.c.l.b16 %v403
          %v436 = vunpack.c.l.b16 %v404
          %v437 = vunpack.c.l.b16 %v405
          %v438 = vunpack.c.l.b16 %v406
          %v439 = vunpack.c.l.b16 %v407
          %v440 = vunpack.c.l.b16 %v408
          %v441 = vunpack.c.l.b16 %v409
          %v442 = vunpack.c.l.b16 %v410
          %v443 = vunpack.c.l.b16 %v411
          %v444 = vunpack.c.l.b16 %v412
          %v445 = vunpack.c.l.b16 %v413
          %v446 = vunpack.c.l.b16 %v414
          %v447 = vunpack.c.l.b16 %v415
          %v448 = vunpack.c.l.b16 %v416
          %v449 = vunpack.c.l.b16 %v417
          %v450 = vunpack.c.l.b16 %v418
          %v451 = vpack.c.b16 %v436, %v435
          %v452 = vpack.c.b16 %v438, %v437
          %v453 = vpack.c.b16 %v440, %v439
          %v454 = vpack.c.b16 %v442, %v441
          %v455 = vpack.c.b16 %v444, %v443
          %v456 = vpack.c.b16 %v446, %v445
          %v457 = vpack.c.b16 %v448, %v447
          %v458 = vpack.c.b16 %v450, %v449
          %v515 = vunpack.c.l.b16 %v304
          %v516 = vunpack.c.h.b16 %v304
          %v517 = vunpack.c.l.b16 %v305
          %v518 = vunpack.c.h.b16 %v305
          %v519 = vunpack.c.l.b16 %v306
          %v520 = vunpack.c.h.b16 %v306
          %v521 = vunpack.c.l.b16 %v307
          %v522 = vunpack.c.h.b16 %v307
          %v523 = vunpack.c.l.b16 %v308
          %v524 = vunpack.c.h.b16 %v308
          %v525 = vunpack.c.l.b16 %v309
          %v526 = vunpack.c.h.b16 %v309
          %v527 = vunpack.c.l.b16 %v310
          %v528 = vunpack.c.h.b16 %v310
          %v529 = vunpack.c.l.b16 %v311
          %v530 = vunpack.c.h.b16 %v311
          %v531 = vunpack.c.l.b16 %v312
          %v532 = vunpack.c.h.b16 %v312
          %v533 = vunpack.c.l.b16 %v313
          %v534 = vunpack.c.h.b16 %v313
          %v535 = vunpack.c.l.b16 %v314
          %v536 = vunpack.c.h.b16 %v314
          %v537 = vunpack.c.l.b16 %v315
          %v538 = vunpack.c.h.b16 %v315
          %v539 = vunpack.c.l.b16 %v316
          %v540 = vunpack.c.h.b16 %v316
          %v541 = vunpack.c.l.b16 %v317
          %v542 = vunpack.c.h.b16 %v317
          %v543 = vunpack.c.l.b16 %v318
          %v544 = vunpack.c.h.b16 %v318
          %v545 = vunpack.c.l.b16 %v319
          %v546 = vunpack.c.h.b16 %v319
          %v547 = vunpack.c.l.b16 %v320
          %v548 = vunpack.c.h.b16 %v320
          %v549 = vunpack.c.l.b16 %v321
          %v550 = vunpack.c.h.b16 %v321
          %v551 = vunpack.c.l.b16 %v322
          %v552 = vunpack.c.h.b16 %v322
          %v553 = vunpack.c.l.b16 %v323
          %v554 = vunpack.c.h.b16 %v323
          %v555 = vunpack.c.l.b16 %v324
          %v556 = vunpack.c.h.b16 %v324
          %v557 = vunpack.c.l.b16 %v325
          %v558 = vunpack.c.h.b16 %v325
          %v559 = vunpack.c.l.b16 %v326
          %v560 = vunpack.c.h.b16 %v326
          %v561 = vunpack.c.l.b16 %v327
          %v562 = vunpack.c.h.b16 %v327
          %v563 = vunpack.c.l.b16 %v328
          %v564 = vunpack.c.h.b16 %v328
          %v565 = vunpack.c.l.b16 %v329
          %v566 = vunpack.c.h.b16 %v329
          %v567 = vunpack.c.l.b16 %v330
          %v568 = vunpack.c.h.b16 %v330
          %v569 = vunpack.c.l.b16 %v331
          %v570 = vunpack.c.h.b16 %v331
          %v571 = vunpack.c.l.b16 %v332
          %v572 = vunpack.c.h.b16 %v332
          %v573 = vunpack.c.l.b16 %v333
          %v574 = vunpack.c.h.b16 %v333
          %v575 = vunpack.c.l.b16 %v334
          %v576 = vunpack.c.h.b16 %v334
          %v577 = vunpack.c.l.b16 %v335
          %v578 = vunpack.c.h.b16 %v335
          %v579 = vunpack.c.l.b16 %v336
          %v580 = vunpack.c.h.b16 %v336
          %v581 = vunpack.c.l.b16 %v337
          %v582 = vunpack.c.h.b16 %v337
          %v583 = vunpack.c.l.b16 %v338
          %v584 = vunpack.c.h.b16 %v338
          %v585 = vunpack.c.l.b16 %v339
          %v586 = vunpack.c.h.b16 %v339
          %v587 = vunpack.c.l.b16 %v340
          %v588 = vunpack.c.h.b16 %v340
          %v589 = vunpack.c.l.b16 %v341
          %v590 = vunpack.c.h.b16 %v341
          %v591 = vunpack.c.l.b16 %v342
          %v592 = vunpack.c.h.b16 %v342
          %v593 = vunpack.c.l.b16 %v343
          %v594 = vunpack.c.h.b16 %v343
          %v595 = vunpack.c.l.b16 %v344
          %v596 = vunpack.c.h.b16 %v344
          %v597 = vunpack.c.l.b16 %v345
          %v598 = vunpack.c.h.b16 %v345
          %v599 = vunpack.c.l.b16 %v346
          %v600 = vunpack.c.h.b16 %v346
          %v601 = vunpack.c.l.b16 %v347
          %v602 = vunpack.c.h.b16 %v347
          %v603 = vunpack.c.l.b16 %v348
          %v604 = vunpack.c.h.b16 %v348
          %v605 = vunpack.c.l.b16 %v349
          %v606 = vunpack.c.h.b16 %v349
          %v607 = vunpack.c.l.b16 %v350
          %v608 = vunpack.c.h.b16 %v350
          %v609 = vunpack.c.l.b16 %v351
          %v610 = vunpack.c.h.b16 %v351
          %v611 = vpack.c.b16 %v521, %v515
          %v612 = vpack.c.b16 %v522, %v516
          %v613 = vpack.c.b16 %v523, %v517
          %v614 = vpack.c.b16 %v524, %v518
          %v615 = vpack.c.b16 %v525, %v519
          %v616 = vpack.c.b16 %v526, %v520
          %v617 = vpack.c.b16 %v533, %v527
          %v618 = vpack.c.b16 %v534, %v528
          %v619 = vpack.c.b16 %v535, %v529
          %v620 = vpack.c.b16 %v536, %v530
          %v621 = vpack.c.b16 %v537, %v531
          %v622 = vpack.c.b16 %v538, %v532
          %v623 = vpack.c.b16 %v545, %v539
          %v624 = vpack.c.b16 %v546, %v540
          %v625 = vpack.c.b16 %v547, %v541
          %v626 = vpack.c.b16 %v548, %v542
          %v627 = vpack.c.b16 %v549, %v543
          %v628 = vpack.c.b16 %v550, %v544
          %v629 = vpack.c.b16 %v557, %v551
          %v630 = vpack.c.b16 %v558, %v552
          %v631 = vpack.c.b16 %v559, %v553
          %v632 = vpack.c.b16 %v560, %v554
          %v633 = vpack.c.b16 %v561, %v555
          %v634 = vpack.c.b16 %v562, %v556
          %v635 = vpack.c.b16 %v569, %v563
          %v636 = vpack.c.b16 %v570, %v564
          %v637 = vpack.c.b16 %v571, %v565
          %v638 = vpack.c.b16 %v572, %v566
          %v639 = vpack.c.b16 %v573, %v567
          %v640 = vpack.c.b16 %v574, %v568
          %v641 = vpack.c.b16 %v581, %v575
          %v642 = vpack.c.b16 %v582, %v576
          %v643 = vpack.c.b16 %v583, %v577
          %v644 = vpack.c.b16 %v584, %v578
          %v645 = vpack.c.b16 %v585, %v579
          %v646 = vpack.c.b16 %v586, %v580
          %v647 = vpack.c.b16 %v593, %v587
          %v648 = vpack.c.b16 %v594, %v588
          %v649 = vpack.c.b16 %v595, %v589
          %v650 = vpack.c.b16 %v596, %v590
          %v651 = vpack.c.b16 %v597, %v591
          %v652 = vpack.c.b16 %v598, %v592
          %v653 = vpack.c.b16 %v605, %v599
          %v654 = vpack.c.b16 %v606, %v600
          %v655 = vpack.c.b16 %v607, %v601
          %v656 = vpack.c.b16 %v608, %v602
          %v657 = vpack.c.b16 %v609, %v603
          %v658 = vpack.c.b16 %v610, %v604
          %707 = vmatprep.subr.bf16.mxu0 %v654
          %708 = vmatpush1.bf16.msra.mxu0 %v653
          %709 = vmatprep.subr.bf16.mxu0 %v648
          %710 = vmatpush1.bf16.msra.mxu0 %v647
          %711 = vmatprep.subr.bf16.mxu0 %v642
          %712 = vmatpush1.bf16.msra.mxu0 %v641
          %713 = vmatprep.subr.bf16.mxu0 %v636
          %714 = vmatpush1.bf16.msra.mxu0 %v635
          %715 = vmatprep.subr.bf16.mxu0 %v630
          %716 = vmatpush1.bf16.msra.mxu0 %v629
          %717 = vmatprep.subr.bf16.mxu0 %v624
          %718 = vmatpush1.bf16.msra.mxu0 %v623
          %719 = vmatprep.subr.bf16.mxu0 %v618
          %720 = vmatpush1.bf16.msra.mxu0 %v617
          %721 = vmatprep.subr.bf16.mxu0 %v612
          %722 = vmatpush1.bf16.msra.mxu0 %v611
          %723 = vmatprep.subr.bf16.mxu0 0
          %724 = vmatpush2.bf16.msra.mxu0 0
          %725 = vmatprep.subr.bf16.mxu0 0
          %726 = vmatpush2.bf16.msra.mxu0 0
          %727 = vmatprep.subr.bf16.mxu0 0
          %728 = vmatpush2.bf16.msra.mxu0 0
          %729 = vmatprep.subr.bf16.mxu0 0
          %730 = vmatpush2.bf16.msra.mxu0 0
          %731 = vmatprep.subr.bf16.mxu0 0
          %732 = vmatpush2.bf16.msra.mxu0 0
          %733 = vmatprep.subr.bf16.mxu0 0
          %734 = vmatpush2.bf16.msra.mxu0 0
          %735 = vmatprep.subr.bf16.mxu0 0
          %736 = vmatpush2.bf16.msra.mxu0 0
          %737 = vmatprep.subr.bf16.mxu0 0
          %738 = vmatpush2.bf16.msra.mxu0 0
          %739 = vmatprep.mubr.bf16.mxu0 0
          %740 = vmatmul.mubr.bf16.gmra.mxu0 %v451
          %v741 = vpop.f32.mrf.mxu0
          %v742 = vadd.f32 0.0, %v741
          %v743 = vpop.f32.mrf.mxu0
          %v744 = vadd.f32 0.0, %v743
          %v745 = vpop.f32.mrf.mxu0
          %v746 = vadd.f32 0.0, %v745
          %v747 = vpop.f32.mrf.mxu0
          %v748 = vadd.f32 0.0, %v747
          %749 = vmatprep.mubr.bf16.mxu0 0
          %750 = vmatmul.mubr.bf16.gmra.mxu0 %v452
          %v751 = vpop.f32.mrf.mxu0
          %v752 = vadd.f32 0.0, %v751
          %v753 = vpop.f32.mrf.mxu0
          %v754 = vadd.f32 0.0, %v753
          %v755 = vpop.f32.mrf.mxu0
          %v756 = vadd.f32 0.0, %v755
          %v757 = vpop.f32.mrf.mxu0
          %v758 = vadd.f32 0.0, %v757
          %759 = vmatprep.mubr.bf16.mxu0 0
          %760 = vmatmul.mubr.bf16.gmra.mxu0 %v453
          %v761 = vpop.f32.mrf.mxu0
          %v762 = vadd.f32 0.0, %v761
          %v763 = vpop.f32.mrf.mxu0
          %v764 = vadd.f32 0.0, %v763
          %v765 = vpop.f32.mrf.mxu0
          %v766 = vadd.f32 0.0, %v765
          %v767 = vpop.f32.mrf.mxu0
          %v768 = vadd.f32 0.0, %v767
          %769 = vmatprep.mubr.bf16.mxu0 0
          %770 = vmatmul.mubr.bf16.gmra.mxu0 %v454
          %v771 = vpop.f32.mrf.mxu0
          %v772 = vadd.f32 0.0, %v771
          %v773 = vpop.f32.mrf.mxu0
          %v774 = vadd.f32 0.0, %v773
          %v775 = vpop.f32.mrf.mxu0
          %v776 = vadd.f32 0.0, %v775
          %v777 = vpop.f32.mrf.mxu0
          %v778 = vadd.f32 0.0, %v777
          %779 = vmatprep.mubr.bf16.mxu0 0
          %780 = vmatmul.mubr.bf16.gmra.mxu0 %v455
          %v781 = vpop.f32.mrf.mxu0
          %v782 = vadd.f32 0.0, %v781
          %v783 = vpop.f32.mrf.mxu0
          %v784 = vadd.f32 0.0, %v783
          %v785 = vpop.f32.mrf.mxu0
          %v786 = vadd.f32 0.0, %v785
          %v787 = vpop.f32.mrf.mxu0
          %v788 = vadd.f32 0.0, %v787
          %789 = vmatprep.mubr.bf16.mxu0 0
          %790 = vmatmul.mubr.bf16.gmra.mxu0 %v456
          %v791 = vpop.f32.mrf.mxu0
          %v792 = vadd.f32 0.0, %v791
          %v793 = vpop.f32.mrf.mxu0
          %v794 = vadd.f32 0.0, %v793
          %v795 = vpop.f32.mrf.mxu0
          %v796 = vadd.f32 0.0, %v795
          %v797 = vpop.f32.mrf.mxu0
          %v798 = vadd.f32 0.0, %v797
          %799 = vmatprep.mubr.bf16.mxu0 0
          %800 = vmatmul.mubr.bf16.gmra.mxu0 %v457
          %v801 = vpop.f32.mrf.mxu0
          %v802 = vadd.f32 0.0, %v801
          %v803 = vpop.f32.mrf.mxu0
          %v804 = vadd.f32 0.0, %v803
          %v805 = vpop.f32.mrf.mxu0
          %v806 = vadd.f32 0.0, %v805
          %v807 = vpop.f32.mrf.mxu0
          %v808 = vadd.f32 0.0, %v807
          %809 = vmatprep.mubr.bf16.mxu0 0
          %810 = vmatmul.mubr.bf16.gmra.mxu0 %v458
          %v811 = vpop.f32.mrf.mxu0
          %v812 = vadd.f32 0.0, %v811
          %v813 = vpop.f32.mrf.mxu0
          %v814 = vadd.f32 0.0, %v813
          %v815 = vpop.f32.mrf.mxu0
          %v816 = vadd.f32 0.0, %v815
          %v817 = vpop.f32.mrf.mxu0
          %v818 = vadd.f32 0.0, %v817
          %819 = vdwg.mxu0
          %820 = vmatprep.subr.bf16.mxu0 %v656
          %821 = vmatpush1.bf16.msra.mxu0 %v655
          %822 = vmatprep.subr.bf16.mxu0 %v650
          %823 = vmatpush1.bf16.msra.mxu0 %v649
          %824 = vmatprep.subr.bf16.mxu0 %v644
          %825 = vmatpush1.bf16.msra.mxu0 %v643
          %826 = vmatprep.subr.bf16.mxu0 %v638
          %827 = vmatpush1.bf16.msra.mxu0 %v637
          %828 = vmatprep.subr.bf16.mxu0 %v632
          %829 = vmatpush1.bf16.msra.mxu0 %v631
          %830 = vmatprep.subr.bf16.mxu0 %v626
          %831 = vmatpush1.bf16.msra.mxu0 %v625
          %832 = vmatprep.subr.bf16.mxu0 %v620
          %833 = vmatpush1.bf16.msra.mxu0 %v619
          %834 = vmatprep.subr.bf16.mxu0 %v614
          %835 = vmatpush1.bf16.msra.mxu0 %v613
          %836 = vmatprep.subr.bf16.mxu0 0
          %837 = vmatpush2.bf16.msra.mxu0 0
          %838 = vmatprep.subr.bf16.mxu0 0
          %839 = vmatpush2.bf16.msra.mxu0 0
          %840 = vmatprep.subr.bf16.mxu0 0
          %841 = vmatpush2.bf16.msra.mxu0 0
          %842 = vmatprep.subr.bf16.mxu0 0
          %843 = vmatpush2.bf16.msra.mxu0 0
          %844 = vmatprep.subr.bf16.mxu0 0
          %845 = vmatpush2.bf16.msra.mxu0 0
          %846 = vmatprep.subr.bf16.mxu0 0
          %847 = vmatpush2.bf16.msra.mxu0 0
          %848 = vmatprep.subr.bf16.mxu0 0
          %849 = vmatpush2.bf16.msra.mxu0 0
          %850 = vmatprep.subr.bf16.mxu0 0
          %851 = vmatpush2.bf16.msra.mxu0 0
          %852 = vmatprep.mubr.bf16.mxu0 0
          %853 = vmatmul.mubr.bf16.gmra.mxu0 %v451
          %v854 = vpop.f32.mrf.mxu0
          %v855 = vadd.f32 0.0, %v854
          %v856 = vpop.f32.mrf.mxu0
          %v857 = vadd.f32 0.0, %v856
          %v858 = vpop.f32.mrf.mxu0
          %v859 = vadd.f32 0.0, %v858
          %v860 = vpop.f32.mrf.mxu0
          %v861 = vadd.f32 0.0, %v860
          %862 = vmatprep.mubr.bf16.mxu0 0
          %863 = vmatmul.mubr.bf16.gmra.mxu0 %v452
          %v864 = vpop.f32.mrf.mxu0
          %v865 = vadd.f32 0.0, %v864
          %v866 = vpop.f32.mrf.mxu0
          %v867 = vadd.f32 0.0, %v866
          %v868 = vpop.f32.mrf.mxu0
          %v869 = vadd.f32 0.0, %v868
          %v870 = vpop.f32.mrf.mxu0
          %v871 = vadd.f32 0.0, %v870
          %872 = vmatprep.mubr.bf16.mxu0 0
          %873 = vmatmul.mubr.bf16.gmra.mxu0 %v453
          %v874 = vpop.f32.mrf.mxu0
          %v875 = vadd.f32 0.0, %v874
          %v876 = vpop.f32.mrf.mxu0
          %v877 = vadd.f32 0.0, %v876
          %v878 = vpop.f32.mrf.mxu0
          %v879 = vadd.f32 0.0, %v878
          %v880 = vpop.f32.mrf.mxu0
          %v881 = vadd.f32 0.0, %v880
          %882 = vmatprep.mubr.bf16.mxu0 0
          %883 = vmatmul.mubr.bf16.gmra.mxu0 %v454
          %v884 = vpop.f32.mrf.mxu0
          %v885 = vadd.f32 0.0, %v884
          %v886 = vpop.f32.mrf.mxu0
          %v887 = vadd.f32 0.0, %v886
          %v888 = vpop.f32.mrf.mxu0
          %v889 = vadd.f32 0.0, %v888
          %v890 = vpop.f32.mrf.mxu0
          %v891 = vadd.f32 0.0, %v890
          %892 = vmatprep.mubr.bf16.mxu0 0
          %893 = vmatmul.mubr.bf16.gmra.mxu0 %v455
          %v894 = vpop.f32.mrf.mxu0
          %v895 = vadd.f32 0.0, %v894
          %v896 = vpop.f32.mrf.mxu0
          %v897 = vadd.f32 0.0, %v896
          %v898 = vpop.f32.mrf.mxu0
          %v899 = vadd.f32 0.0, %v898
          %v900 = vpop.f32.mrf.mxu0
          %v901 = vadd.f32 0.0, %v900
          %902 = vmatprep.mubr.bf16.mxu0 0
          %903 = vmatmul.mubr.bf16.gmra.mxu0 %v456
          %v904 = vpop.f32.mrf.mxu0
          %v905 = vadd.f32 0.0, %v904
          %v906 = vpop.f32.mrf.mxu0
          %v907 = vadd.f32 0.0, %v906
          %v908 = vpop.f32.mrf.mxu0
          %v909 = vadd.f32 0.0, %v908
          %v910 = vpop.f32.mrf.mxu0
          %v911 = vadd.f32 0.0, %v910
          %912 = vmatprep.mubr.bf16.mxu0 0
          %913 = vmatmul.mubr.bf16.gmra.mxu0 %v457
          %v914 = vpop.f32.mrf.mxu0
          %v915 = vadd.f32 0.0, %v914
          %v916 = vpop.f32.mrf.mxu0
          %v917 = vadd.f32 0.0, %v916
          %v918 = vpop.f32.mrf.mxu0
          %v919 = vadd.f32 0.0, %v918
          %v920 = vpop.f32.mrf.mxu0
          %v921 = vadd.f32 0.0, %v920
          %922 = vmatprep.mubr.bf16.mxu0 0
          %923 = vmatmul.mubr.bf16.gmra.mxu0 %v458
          %v924 = vpop.f32.mrf.mxu0
          %v925 = vadd.f32 0.0, %v924
          %v926 = vpop.f32.mrf.mxu0
          %v927 = vadd.f32 0.0, %v926
          %v928 = vpop.f32.mrf.mxu0
          %v929 = vadd.f32 0.0, %v928
          %v930 = vpop.f32.mrf.mxu0
          %v931 = vadd.f32 0.0, %v930
          %932 = vdwg.mxu0
          %933 = vmatprep.subr.bf16.mxu0 %v658
          %934 = vmatpush1.bf16.msra.mxu0 %v657
          %935 = vmatprep.subr.bf16.mxu0 %v652
          %936 = vmatpush1.bf16.msra.mxu0 %v651
          %937 = vmatprep.subr.bf16.mxu0 %v646
          %938 = vmatpush1.bf16.msra.mxu0 %v645
          %939 = vmatprep.subr.bf16.mxu0 %v640
          %940 = vmatpush1.bf16.msra.mxu0 %v639
          %941 = vmatprep.subr.bf16.mxu0 %v634
          %942 = vmatpush1.bf16.msra.mxu0 %v633
          %943 = vmatprep.subr.bf16.mxu0 %v628
          %944 = vmatpush1.bf16.msra.mxu0 %v627
          %945 = vmatprep.subr.bf16.mxu0 %v622
          %946 = vmatpush1.bf16.msra.mxu0 %v621
          %947 = vmatprep.subr.bf16.mxu0 %v616
          %948 = vmatpush1.bf16.msra.mxu0 %v615
          %949 = vmatprep.subr.bf16.mxu0 0
          %950 = vmatpush2.bf16.msra.mxu0 0
          %951 = vmatprep.subr.bf16.mxu0 0
          %952 = vmatpush2.bf16.msra.mxu0 0
          %953 = vmatprep.subr.bf16.mxu0 0
          %954 = vmatpush2.bf16.msra.mxu0 0
          %955 = vmatprep.subr.bf16.mxu0 0
          %956 = vmatpush2.bf16.msra.mxu0 0
          %957 = vmatprep.subr.bf16.mxu0 0
          %958 = vmatpush2.bf16.msra.mxu0 0
          %959 = vmatprep.subr.bf16.mxu0 0
          %960 = vmatpush2.bf16.msra.mxu0 0
          %961 = vmatprep.subr.bf16.mxu0 0
          %962 = vmatpush2.bf16.msra.mxu0 0
          %963 = vmatprep.subr.bf16.mxu0 0
          %964 = vmatpush2.bf16.msra.mxu0 0
          %965 = vmatprep.mubr.bf16.mxu0 0
          %966 = vmatmul.mubr.bf16.gmra.mxu0 %v451
          %v967 = vpop.f32.mrf.mxu0
          %v968 = vadd.f32 0.0, %v967
          %v969 = vpop.f32.mrf.mxu0
          %v970 = vadd.f32 0.0, %v969
          %v971 = vpop.f32.mrf.mxu0
          %v972 = vadd.f32 0.0, %v971
          %v973 = vpop.f32.mrf.mxu0
          %v974 = vadd.f32 0.0, %v973
          %975 = vmatprep.mubr.bf16.mxu0 0
          %976 = vmatmul.mubr.bf16.gmra.mxu0 %v452
          %v977 = vpop.f32.mrf.mxu0
          %v978 = vadd.f32 0.0, %v977
          %v979 = vpop.f32.mrf.mxu0
          %v980 = vadd.f32 0.0, %v979
          %v981 = vpop.f32.mrf.mxu0
          %v982 = vadd.f32 0.0, %v981
          %v983 = vpop.f32.mrf.mxu0
          %v984 = vadd.f32 0.0, %v983
          %985 = vmatprep.mubr.bf16.mxu0 0
          %986 = vmatmul.mubr.bf16.gmra.mxu0 %v453
          %v987 = vpop.f32.mrf.mxu0
          %v988 = vadd.f32 0.0, %v987
          %v989 = vpop.f32.mrf.mxu0
          %v990 = vadd.f32 0.0, %v989
          %v991 = vpop.f32.mrf.mxu0
          %v992 = vadd.f32 0.0, %v991
          %v993 = vpop.f32.mrf.mxu0
          %v994 = vadd.f32 0.0, %v993
          %995 = vmatprep.mubr.bf16.mxu0 0
          %996 = vmatmul.mubr.bf16.gmra.mxu0 %v454
          %v997 = vpop.f32.mrf.mxu0
          %v998 = vadd.f32 0.0, %v997
          %v999 = vpop.f32.mrf.mxu0
          %v1000 = vadd.f32 0.0, %v999
          %v1001 = vpop.f32.mrf.mxu0
          %v1002 = vadd.f32 0.0, %v1001
          %v1003 = vpop.f32.mrf.mxu0
          %v1004 = vadd.f32 0.0, %v1003
          %1005 = vmatprep.mubr.bf16.mxu0 0
          %1006 = vmatmul.mubr.bf16.gmra.mxu0 %v455
          %v1007 = vpop.f32.mrf.mxu0
          %v1008 = vadd.f32 0.0, %v1007
          %v1009 = vpop.f32.mrf.mxu0
          %v1010 = vadd.f32 0.0, %v1009
          %v1011 = vpop.f32.mrf.mxu0
          %v1012 = vadd.f32 0.0, %v1011
          %v1013 = vpop.f32.mrf.mxu0
          %v1014 = vadd.f32 0.0, %v1013
          %1015 = vmatprep.mubr.bf16.mxu0 0
          %1016 = vmatmul.mubr.bf16.gmra.mxu0 %v456
          %v1017 = vpop.f32.mrf.mxu0
          %v1018 = vadd.f32 0.0, %v1017
          %v1019 = vpop.f32.mrf.mxu0
          %v1020 = vadd.f32 0.0, %v1019
          %v1021 = vpop.f32.mrf.mxu0
          %v1022 = vadd.f32 0.0, %v1021
          %v1023 = vpop.f32.mrf.mxu0
          %v1024 = vadd.f32 0.0, %v1023
          %1025 = vmatprep.mubr.bf16.mxu0 0
          %1026 = vmatmul.mubr.bf16.gmra.mxu0 %v457
          %v1027 = vpop.f32.mrf.mxu0
          %v1028 = vadd.f32 0.0, %v1027
          %v1029 = vpop.f32.mrf.mxu0
          %v1030 = vadd.f32 0.0, %v1029
          %v1031 = vpop.f32.mrf.mxu0
          %v1032 = vadd.f32 0.0, %v1031
          %v1033 = vpop.f32.mrf.mxu0
          %v1034 = vadd.f32 0.0, %v1033
          %1035 = vmatprep.mubr.bf16.mxu0 0
          %1036 = vmatmul.mubr.bf16.gmra.mxu0 %v458
          %v1037 = vpop.f32.mrf.mxu0
          %v1038 = vadd.f32 0.0, %v1037
          %v1039 = vpop.f32.mrf.mxu0
          %v1040 = vadd.f32 0.0, %v1039
          %v1041 = vpop.f32.mrf.mxu0
          %v1042 = vadd.f32 0.0, %v1041
          %v1043 = vpop.f32.mrf.mxu0
          %v1044 = vadd.f32 0.0, %v1043
          %1045 = vdwg.mxu0
          %v1046 = vxor.u32 %v742, 2147483648
          %v1047 = vxor.u32 %v744, 2147483648
          %v1048 = vxor.u32 %v855, 2147483648
          %v1049 = vxor.u32 %v746, 2147483648
          %v1050 = vxor.u32 %v748, 2147483648
          %v1051 = vxor.u32 %v859, 2147483648
          %v1052 = vxor.u32 %v752, 2147483648
          %v1053 = vxor.u32 %v754, 2147483648
          %v1054 = vxor.u32 %v865, 2147483648
          %v1055 = vxor.u32 %v756, 2147483648
          %v1056 = vxor.u32 %v758, 2147483648
          %v1057 = vxor.u32 %v869, 2147483648
          %v1058 = vxor.u32 %v762, 2147483648
          %v1059 = vxor.u32 %v764, 2147483648
          %v1060 = vxor.u32 %v875, 2147483648
          %v1061 = vxor.u32 %v766, 2147483648
          %v1062 = vxor.u32 %v768, 2147483648
          %v1063 = vxor.u32 %v879, 2147483648
          %v1064 = vxor.u32 %v772, 2147483648
          %v1065 = vxor.u32 %v774, 2147483648
          %v1066 = vxor.u32 %v885, 2147483648
          %v1067 = vxor.u32 %v776, 2147483648
          %v1068 = vxor.u32 %v778, 2147483648
          %v1069 = vxor.u32 %v889, 2147483648
          %v1070 = vxor.u32 %v782, 2147483648
          %v1071 = vxor.u32 %v784, 2147483648
          %v1072 = vxor.u32 %v895, 2147483648
          %v1073 = vxor.u32 %v786, 2147483648
          %v1074 = vxor.u32 %v788, 2147483648
          %v1075 = vxor.u32 %v899, 2147483648
          %v1076 = vxor.u32 %v792, 2147483648
          %v1077 = vxor.u32 %v794, 2147483648
          %v1078 = vxor.u32 %v905, 2147483648
          %v1079 = vxor.u32 %v796, 2147483648
          %v1080 = vxor.u32 %v798, 2147483648
          %v1081 = vxor.u32 %v909, 2147483648
          %v1082 = vxor.u32 %v802, 2147483648
          %v1083 = vxor.u32 %v804, 2147483648
          %v1084 = vxor.u32 %v915, 2147483648
          %v1085 = vxor.u32 %v806, 2147483648
          %v1086 = vxor.u32 %v808, 2147483648
          %v1087 = vxor.u32 %v919, 2147483648
          %v1088 = vxor.u32 %v812, 2147483648
          %v1089 = vxor.u32 %v814, 2147483648
          %v1090 = vxor.u32 %v925, 2147483648
          %v1091 = vxor.u32 %v816, 2147483648
          %v1092 = vxor.u32 %v818, 2147483648
          %v1093 = vxor.u32 %v929, 2147483648
          %v1094 = vmul.f32 %v1046, 1.442695
          %v1095 = vpow.pop %v1094
          %v1096 = vmul.f32 %v1047, 1.442695
          %v1097 = vpow.pop %v1096
          %v1098 = vmul.f32 %v1048, 1.442695
          %v1099 = vpow.pop %v1098
          %v1100 = vmul.f32 %v1049, 1.442695
          %v1101 = vpow.pop %v1100
          %v1102 = vmul.f32 %v1050, 1.442695
          %v1103 = vpow.pop %v1102
          %v1104 = vmul.f32 %v1051, 1.442695
          %v1105 = vpow.pop %v1104
          %v1106 = vmul.f32 %v1052, 1.442695
          %v1107 = vpow.pop %v1106
          %v1108 = vmul.f32 %v1053, 1.442695
          %v1109 = vpow.pop %v1108
          %v1110 = vmul.f32 %v1054, 1.442695
          %v1111 = vpow.pop %v1110
          %v1112 = vmul.f32 %v1055, 1.442695
          %v1113 = vpow.pop %v1112
          %v1114 = vmul.f32 %v1056, 1.442695
          %v1115 = vpow.pop %v1114
          %v1116 = vmul.f32 %v1057, 1.442695
          %v1117 = vpow.pop %v1116
          %v1118 = vmul.f32 %v1058, 1.442695
          %v1119 = vpow.pop %v1118
          %v1120 = vmul.f32 %v1059, 1.442695
          %v1121 = vpow.pop %v1120
          %v1122 = vmul.f32 %v1060, 1.442695
          %v1123 = vpow.pop %v1122
          %v1124 = vmul.f32 %v1061, 1.442695
          %v1125 = vpow.pop %v1124
          %v1126 = vmul.f32 %v1062, 1.442695
          %v1127 = vpow.pop %v1126
          %v1128 = vmul.f32 %v1063, 1.442695
          %v1129 = vpow.pop %v1128
          %v1130 = vmul.f32 %v1064, 1.442695
          %v1131 = vpow.pop %v1130
          %v1132 = vmul.f32 %v1065, 1.442695
          %v1133 = vpow.pop %v1132
          %v1134 = vmul.f32 %v1066, 1.442695
          %v1135 = vpow.pop %v1134
          %v1136 = vmul.f32 %v1067, 1.442695
          %v1137 = vpow.pop %v1136
          %v1138 = vmul.f32 %v1068, 1.442695
          %v1139 = vpow.pop %v1138
          %v1140 = vmul.f32 %v1069, 1.442695
          %v1141 = vpow.pop %v1140
          %v1142 = vmul.f32 %v1070, 1.442695
          %v1143 = vpow.pop %v1142
          %v1144 = vmul.f32 %v1071, 1.442695
          %v1145 = vpow.pop %v1144
          %v1146 = vmul.f32 %v1072, 1.442695
          %v1147 = vpow.pop %v1146
          %v1148 = vmul.f32 %v1073, 1.442695
          %v1149 = vpow.pop %v1148
          %v1150 = vmul.f32 %v1074, 1.442695
          %v1151 = vpow.pop %v1150
          %v1152 = vmul.f32 %v1075, 1.442695
          %v1153 = vpow.pop %v1152
          %v1154 = vmul.f32 %v1076, 1.442695
          %v1155 = vpow.pop %v1154
          %v1156 = vmul.f32 %v1077, 1.442695
          %v1157 = vpow.pop %v1156
          %v1158 = vmul.f32 %v1078, 1.442695
          %v1159 = vpow.pop %v1158
          %v1160 = vmul.f32 %v1079, 1.442695
          %v1161 = vpow.pop %v1160
          %v1162 = vmul.f32 %v1080, 1.442695
          %v1163 = vpow.pop %v1162
          %v1164 = vmul.f32 %v1081, 1.442695
          %v1165 = vpow.pop %v1164
          %v1166 = vmul.f32 %v1082, 1.442695
          %v1167 = vpow.pop %v1166
          %v1168 = vmul.f32 %v1083, 1.442695
          %v1169 = vpow.pop %v1168
          %v1170 = vmul.f32 %v1084, 1.442695
          %v1171 = vpow.pop %v1170
          %v1172 = vmul.f32 %v1085, 1.442695
          %v1173 = vpow.pop %v1172
          %v1174 = vmul.f32 %v1086, 1.442695
          %v1175 = vpow.pop %v1174
          %v1176 = vmul.f32 %v1087, 1.442695
          %v1177 = vpow.pop %v1176
          %v1178 = vmul.f32 %v1088, 1.442695
          %v1179 = vpow.pop %v1178
          %v1180 = vmul.f32 %v1089, 1.442695
          %v1181 = vpow.pop %v1180
          %v1182 = vmul.f32 %v1090, 1.442695
          %v1183 = vpow.pop %v1182
          %v1184 = vmul.f32 %v1091, 1.442695
          %v1185 = vpow.pop %v1184
          %v1186 = vmul.f32 %v1092, 1.442695
          %v1187 = vpow.pop %v1186
          %v1188 = vmul.f32 %v1093, 1.442695
          %v1189 = vpow.pop %v1188
          %v1190 = vadd.f32 %v1095, 1.0
          %v1191 = vadd.f32 %v1097, 1.0
          %v1192 = vadd.f32 %v1099, 1.0
          %v1193 = vadd.f32 %v1101, 1.0
          %v1194 = vadd.f32 %v1103, 1.0
          %v1195 = vadd.f32 %v1105, 1.0
          %v1196 = vadd.f32 %v1107, 1.0
          %v1197 = vadd.f32 %v1109, 1.0
          %v1198 = vadd.f32 %v1111, 1.0
          %v1199 = vadd.f32 %v1113, 1.0
          %v1200 = vadd.f32 %v1115, 1.0
          %v1201 = vadd.f32 %v1117, 1.0
          %v1202 = vadd.f32 %v1119, 1.0
          %v1203 = vadd.f32 %v1121, 1.0
          %v1204 = vadd.f32 %v1123, 1.0
          %v1205 = vadd.f32 %v1125, 1.0
          %v1206 = vadd.f32 %v1127, 1.0
          %v1207 = vadd.f32 %v1129, 1.0
          %v1208 = vadd.f32 %v1131, 1.0
          %v1209 = vadd.f32 %v1133, 1.0
          %v1210 = vadd.f32 %v1135, 1.0
          %v1211 = vadd.f32 %v1137, 1.0
          %v1212 = vadd.f32 %v1139, 1.0
          %v1213 = vadd.f32 %v1141, 1.0
          %v1214 = vadd.f32 %v1143, 1.0
          %v1215 = vadd.f32 %v1145, 1.0
          %v1216 = vadd.f32 %v1147, 1.0
          %v1217 = vadd.f32 %v1149, 1.0
          %v1218 = vadd.f32 %v1151, 1.0
          %v1219 = vadd.f32 %v1153, 1.0
          %v1220 = vadd.f32 %v1155, 1.0
          %v1221 = vadd.f32 %v1157, 1.0
          %v1222 = vadd.f32 %v1159, 1.0
          %v1223 = vadd.f32 %v1161, 1.0
          %v1224 = vadd.f32 %v1163, 1.0
          %v1225 = vadd.f32 %v1165, 1.0
          %v1226 = vadd.f32 %v1167, 1.0
          %v1227 = vadd.f32 %v1169, 1.0
          %v1228 = vadd.f32 %v1171, 1.0
          %v1229 = vadd.f32 %v1173, 1.0
          %v1230 = vadd.f32 %v1175, 1.0
          %v1231 = vadd.f32 %v1177, 1.0
          %v1232 = vadd.f32 %v1179, 1.0
          %v1233 = vadd.f32 %v1181, 1.0
          %v1234 = vadd.f32 %v1183, 1.0
          %v1235 = vadd.f32 %v1185, 1.0
          %v1236 = vadd.f32 %v1187, 1.0
          %v1237 = vadd.f32 %v1189, 1.0
          %v1238 = vrcp.pop %v1190
          %v1239 = vmul.f32 1.0, %v1238
          %v1240 = vrcp.pop %v1191
          %v1241 = vmul.f32 1.0, %v1240
          %v1242 = vrcp.pop %v1192
          %v1243 = vmul.f32 1.0, %v1242
          %v1244 = vrcp.pop %v1193
          %v1245 = vmul.f32 1.0, %v1244
          %v1246 = vrcp.pop %v1194
          %v1247 = vmul.f32 1.0, %v1246
          %v1248 = vrcp.pop %v1195
          %v1249 = vmul.f32 1.0, %v1248
          %v1250 = vrcp.pop %v1196
          %v1251 = vmul.f32 1.0, %v1250
          %v1252 = vrcp.pop %v1197
          %v1253 = vmul.f32 1.0, %v1252
          %v1254 = vrcp.pop %v1198
          %v1255 = vmul.f32 1.0, %v1254
          %v1256 = vrcp.pop %v1199
          %v1257 = vmul.f32 1.0, %v1256
          %v1258 = vrcp.pop %v1200
          %v1259 = vmul.f32 1.0, %v1258
          %v1260 = vrcp.pop %v1201
          %v1261 = vmul.f32 1.0, %v1260
          %v1262 = vrcp.pop %v1202
          %v1263 = vmul.f32 1.0, %v1262
          %v1264 = vrcp.pop %v1203
          %v1265 = vmul.f32 1.0, %v1264
          %v1266 = vrcp.pop %v1204
          %v1267 = vmul.f32 1.0, %v1266
          %v1268 = vrcp.pop %v1205
          %v1269 = vmul.f32 1.0, %v1268
          %v1270 = vrcp.pop %v1206
          %v1271 = vmul.f32 1.0, %v1270
          %v1272 = vrcp.pop %v1207
          %v1273 = vmul.f32 1.0, %v1272
          %v1274 = vrcp.pop %v1208
          %v1275 = vmul.f32 1.0, %v1274
          %v1276 = vrcp.pop %v1209
          %v1277 = vmul.f32 1.0, %v1276
          %v1278 = vrcp.pop %v1210
          %v1279 = vmul.f32 1.0, %v1278
          %v1280 = vrcp.pop %v1211
          %v1281 = vmul.f32 1.0, %v1280
          %v1282 = vrcp.pop %v1212
          %v1283 = vmul.f32 1.0, %v1282
          %v1284 = vrcp.pop %v1213
          %v1285 = vmul.f32 1.0, %v1284
          %v1286 = vrcp.pop %v1214
          %v1287 = vmul.f32 1.0, %v1286
          %v1288 = vrcp.pop %v1215
          %v1289 = vmul.f32 1.0, %v1288
          %v1290 = vrcp.pop %v1216
          %v1291 = vmul.f32 1.0, %v1290
          %v1292 = vrcp.pop %v1217
          %v1293 = vmul.f32 1.0, %v1292
          %v1294 = vrcp.pop %v1218
          %v1295 = vmul.f32 1.0, %v1294
          %v1296 = vrcp.pop %v1219
          %v1297 = vmul.f32 1.0, %v1296
          %v1298 = vrcp.pop %v1220
          %v1299 = vmul.f32 1.0, %v1298
          %v1300 = vrcp.pop %v1221
          %v1301 = vmul.f32 1.0, %v1300
          %v1302 = vrcp.pop %v1222
          %v1303 = vmul.f32 1.0, %v1302
          %v1304 = vrcp.pop %v1223
          %v1305 = vmul.f32 1.0, %v1304
          %v1306 = vrcp.pop %v1224
          %v1307 = vmul.f32 1.0, %v1306
          %v1308 = vrcp.pop %v1225
          %v1309 = vmul.f32 1.0, %v1308
          %v1310 = vrcp.pop %v1226
          %v1311 = vmul.f32 1.0, %v1310
          %v1312 = vrcp.pop %v1227
          %v1313 = vmul.f32 1.0, %v1312
          %v1314 = vrcp.pop %v1228
          %v1315 = vmul.f32 1.0, %v1314
          %v1316 = vrcp.pop %v1229
          %v1317 = vmul.f32 1.0, %v1316
          %v1318 = vrcp.pop %v1230
          %v1319 = vmul.f32 1.0, %v1318
          %v1320 = vrcp.pop %v1231
          %v1321 = vmul.f32 1.0, %v1320
          %v1322 = vrcp.pop %v1232
          %v1323 = vmul.f32 1.0, %v1322
          %v1324 = vrcp.pop %v1233
          %v1325 = vmul.f32 1.0, %v1324
          %v1326 = vrcp.pop %v1234
          %v1327 = vmul.f32 1.0, %v1326
          %v1328 = vrcp.pop %v1235
          %v1329 = vmul.f32 1.0, %v1328
          %v1330 = vrcp.pop %v1236
          %v1331 = vmul.f32 1.0, %v1330
          %v1332 = vrcp.pop %v1237
          %v1333 = vmul.f32 1.0, %v1332
          %v1334 = vmul.f32 %v742, %v1239
          %v1335 = vmul.f32 %v744, %v1241
          %v1336 = vmul.f32 %v855, %v1243
          %v1337 = vmul.f32 %v746, %v1245
          %v1338 = vmul.f32 %v748, %v1247
          %v1339 = vmul.f32 %v859, %v1249
          %v1340 = vmul.f32 %v752, %v1251
          %v1341 = vmul.f32 %v754, %v1253
          %v1342 = vmul.f32 %v865, %v1255
          %v1343 = vmul.f32 %v756, %v1257
          %v1344 = vmul.f32 %v758, %v1259
          %v1345 = vmul.f32 %v869, %v1261
          %v1346 = vmul.f32 %v762, %v1263
          %v1347 = vmul.f32 %v764, %v1265
          %v1348 = vmul.f32 %v875, %v1267
          %v1349 = vmul.f32 %v766, %v1269
          %v1350 = vmul.f32 %v768, %v1271
          %v1351 = vmul.f32 %v879, %v1273
          %v1352 = vmul.f32 %v772, %v1275
          %v1353 = vmul.f32 %v774, %v1277
          %v1354 = vmul.f32 %v885, %v1279
          %v1355 = vmul.f32 %v776, %v1281
          %v1356 = vmul.f32 %v778, %v1283
          %v1357 = vmul.f32 %v889, %v1285
          %v1358 = vmul.f32 %v782, %v1287
          %v1359 = vmul.f32 %v784, %v1289
          %v1360 = vmul.f32 %v895, %v1291
          %v1361 = vmul.f32 %v786, %v1293
          %v1362 = vmul.f32 %v788, %v1295
          %v1363 = vmul.f32 %v899, %v1297
          %v1364 = vmul.f32 %v792, %v1299
          %v1365 = vmul.f32 %v794, %v1301
          %v1366 = vmul.f32 %v905, %v1303
          %v1367 = vmul.f32 %v796, %v1305
          %v1368 = vmul.f32 %v798, %v1307
          %v1369 = vmul.f32 %v909, %v1309
          %v1370 = vmul.f32 %v802, %v1311
          %v1371 = vmul.f32 %v804, %v1313
          %v1372 = vmul.f32 %v915, %v1315
          %v1373 = vmul.f32 %v806, %v1317
          %v1374 = vmul.f32 %v808, %v1319
          %v1375 = vmul.f32 %v919, %v1321
          %v1376 = vmul.f32 %v812, %v1323
          %v1377 = vmul.f32 %v814, %v1325
          %v1378 = vmul.f32 %v925, %v1327
          %v1379 = vmul.f32 %v816, %v1329
          %v1380 = vmul.f32 %v818, %v1331
          %v1381 = vmul.f32 %v929, %v1333
          %v1382 = vmul.f32 %v1334, %v857
          %v1383 = vmul.f32 %v1335, %v968
          %v1384 = vmul.f32 %v1336, %v970
          %v1385 = vmul.f32 %v1337, %v861
          %v1386 = vmul.f32 %v1338, %v972
          %v1387 = vmul.f32 %v1339, %v974
          %v1388 = vmul.f32 %v1340, %v867
          %v1389 = vmul.f32 %v1341, %v978
          %v1390 = vmul.f32 %v1342, %v980
          %v1391 = vmul.f32 %v1343, %v871
          %v1392 = vmul.f32 %v1344, %v982
          %v1393 = vmul.f32 %v1345, %v984
          %v1394 = vmul.f32 %v1346, %v877
          %v1395 = vmul.f32 %v1347, %v988
          %v1396 = vmul.f32 %v1348, %v990
          %v1397 = vmul.f32 %v1349, %v881
          %v1398 = vmul.f32 %v1350, %v992
          %v1399 = vmul.f32 %v1351, %v994
          %v1400 = vmul.f32 %v1352, %v887
          %v1401 = vmul.f32 %v1353, %v998
          %v1402 = vmul.f32 %v1354, %v1000
          %v1403 = vmul.f32 %v1355, %v891
          %v1404 = vmul.f32 %v1356, %v1002
          %v1405 = vmul.f32 %v1357, %v1004
          %v1406 = vmul.f32 %v1358, %v897
          %v1407 = vmul.f32 %v1359, %v1008
          %v1408 = vmul.f32 %v1360, %v1010
          %v1409 = vmul.f32 %v1361, %v901
          %v1410 = vmul.f32 %v1362, %v1012
          %v1411 = vmul.f32 %v1363, %v1014
          %v1412 = vmul.f32 %v1364, %v907
          %v1413 = vmul.f32 %v1365, %v1018
          %v1414 = vmul.f32 %v1366, %v1020
          %v1415 = vmul.f32 %v1367, %v911
          %v1416 = vmul.f32 %v1368, %v1022
          %v1417 = vmul.f32 %v1369, %v1024
          %v1418 = vmul.f32 %v1370, %v917
          %v1419 = vmul.f32 %v1371, %v1028
          %v1420 = vmul.f32 %v1372, %v1030
          %v1421 = vmul.f32 %v1373, %v921
          %v1422 = vmul.f32 %v1374, %v1032
          %v1423 = vmul.f32 %v1375, %v1034
          %v1424 = vmul.f32 %v1376, %v927
          %v1425 = vmul.f32 %v1377, %v1038
          %v1426 = vmul.f32 %v1378, %v1040
          %v1427 = vmul.f32 %v1379, %v931
          %v1428 = vmul.f32 %v1380, %v1042
          %v1429 = vmul.f32 %v1381, %v1044
          %v1430 = vpack.c.bf16 %v1385, %v1382
          %v1431 = vpack.c.bf16 %v1386, %v1383
          %v1432 = vpack.c.bf16 %v1387, %v1384
          %v1433 = vpack.c.bf16 %v1391, %v1388
          %v1434 = vpack.c.bf16 %v1392, %v1389
          %v1435 = vpack.c.bf16 %v1393, %v1390
          %v1436 = vpack.c.bf16 %v1397, %v1394
          %v1437 = vpack.c.bf16 %v1398, %v1395
          %v1438 = vpack.c.bf16 %v1399, %v1396
          %v1439 = vpack.c.bf16 %v1403, %v1400
          %v1440 = vpack.c.bf16 %v1404, %v1401
          %v1441 = vpack.c.bf16 %v1405, %v1402
          %v1442 = vpack.c.bf16 %v1409, %v1406
          %v1443 = vpack.c.bf16 %v1410, %v1407
          %v1444 = vpack.c.bf16 %v1411, %v1408
          %v1445 = vpack.c.bf16 %v1415, %v1412
          %v1446 = vpack.c.bf16 %v1416, %v1413
          %v1447 = vpack.c.bf16 %v1417, %v1414
          %v1448 = vpack.c.bf16 %v1421, %v1418
          %v1449 = vpack.c.bf16 %v1422, %v1419
          %v1450 = vpack.c.bf16 %v1423, %v1420
          %v1451 = vpack.c.bf16 %v1427, %v1424
          %v1452 = vpack.c.bf16 %v1428, %v1425
          %v1453 = vpack.c.bf16 %v1429, %v1426
          %v1502 = vunpack.c.l.b16 %v355
          %v1503 = vunpack.c.l.b16 %v356
          %v1504 = vunpack.c.l.b16 %v357
          %v1505 = vunpack.c.l.b16 %v358
          %v1506 = vunpack.c.l.b16 %v359
          %v1507 = vunpack.c.l.b16 %v360
          %v1508 = vunpack.c.l.b16 %v361
          %v1509 = vunpack.c.l.b16 %v362
          %v1510 = vunpack.c.l.b16 %v363
          %v1511 = vunpack.c.l.b16 %v364
          %v1512 = vunpack.c.l.b16 %v365
          %v1513 = vunpack.c.l.b16 %v366
          %v1514 = vunpack.c.l.b16 %v367
          %v1515 = vunpack.c.l.b16 %v368
          %v1516 = vunpack.c.l.b16 %v369
          %v1517 = vunpack.c.l.b16 %v370
          %v1518 = vunpack.c.l.b16 %v371
          %v1519 = vunpack.c.l.b16 %v372
          %v1520 = vunpack.c.l.b16 %v373
          %v1521 = vunpack.c.l.b16 %v374
          %v1522 = vunpack.c.l.b16 %v375
          %v1523 = vunpack.c.l.b16 %v376
          %v1524 = vunpack.c.l.b16 %v377
          %v1525 = vunpack.c.l.b16 %v378
          %v1526 = vunpack.c.l.b16 %v379
          %v1527 = vunpack.c.l.b16 %v380
          %v1528 = vunpack.c.l.b16 %v381
          %v1529 = vunpack.c.l.b16 %v382
          %v1530 = vunpack.c.l.b16 %v383
          %v1531 = vunpack.c.l.b16 %v384
          %v1532 = vunpack.c.l.b16 %v385
          %v1533 = vunpack.c.l.b16 %v386
          %v1534 = vunpack.c.l.b16 %v387
          %v1535 = vunpack.c.l.b16 %v388
          %v1536 = vunpack.c.l.b16 %v389
          %v1537 = vunpack.c.l.b16 %v390
          %v1538 = vunpack.c.l.b16 %v391
          %v1539 = vunpack.c.l.b16 %v392
          %v1540 = vunpack.c.l.b16 %v393
          %v1541 = vunpack.c.l.b16 %v394
          %v1542 = vunpack.c.l.b16 %v395
          %v1543 = vunpack.c.l.b16 %v396
          %v1544 = vunpack.c.l.b16 %v397
          %v1545 = vunpack.c.l.b16 %v398
          %v1546 = vunpack.c.l.b16 %v399
          %v1547 = vunpack.c.l.b16 %v400
          %v1548 = vunpack.c.l.b16 %v401
          %v1549 = vunpack.c.l.b16 %v402
          %v1550 = vpack.c.b16 %v1503, %v1502
          %v1551 = vpack.c.b16 %v1505, %v1504
          %v1552 = vpack.c.b16 %v1507, %v1506
          %v1553 = vpack.c.b16 %v1509, %v1508
          %v1554 = vpack.c.b16 %v1511, %v1510
          %v1555 = vpack.c.b16 %v1513, %v1512
          %v1556 = vpack.c.b16 %v1515, %v1514
          %v1557 = vpack.c.b16 %v1517, %v1516
          %v1558 = vpack.c.b16 %v1519, %v1518
          %v1559 = vpack.c.b16 %v1521, %v1520
          %v1560 = vpack.c.b16 %v1523, %v1522
          %v1561 = vpack.c.b16 %v1525, %v1524
          %v1562 = vpack.c.b16 %v1527, %v1526
          %v1563 = vpack.c.b16 %v1529, %v1528
          %v1564 = vpack.c.b16 %v1531, %v1530
          %v1565 = vpack.c.b16 %v1533, %v1532
          %v1566 = vpack.c.b16 %v1535, %v1534
          %v1567 = vpack.c.b16 %v1537, %v1536
          %v1568 = vpack.c.b16 %v1539, %v1538
          %v1569 = vpack.c.b16 %v1541, %v1540
          %v1570 = vpack.c.b16 %v1543, %v1542
          %v1571 = vpack.c.b16 %v1545, %v1544
          %v1572 = vpack.c.b16 %v1547, %v1546
          %v1573 = vpack.c.b16 %v1549, %v1548
          %1598 = vmatprep.subr.bf16.mxu0 0
          %1599 = vmatpush1.bf16.msra.mxu0 %v1557
          %1600 = vmatprep.subr.bf16.mxu0 0
          %1601 = vmatpush1.bf16.msra.mxu0 %v1556
          %1602 = vmatprep.subr.bf16.mxu0 0
          %1603 = vmatpush1.bf16.msra.mxu0 %v1555
          %1604 = vmatprep.subr.bf16.mxu0 0
          %1605 = vmatpush1.bf16.msra.mxu0 %v1554
          %1606 = vmatprep.subr.bf16.mxu0 0
          %1607 = vmatpush1.bf16.msra.mxu0 %v1553
          %1608 = vmatprep.subr.bf16.mxu0 0
          %1609 = vmatpush1.bf16.msra.mxu0 %v1552
          %1610 = vmatprep.subr.bf16.mxu0 0
          %1611 = vmatpush1.bf16.msra.mxu0 %v1551
          %1612 = vmatprep.subr.bf16.mxu0 0
          %1613 = vmatpush1.bf16.msra.mxu0 %v1550
          %1614 = vmatprep.subr.bf16.mxu0 0
          %1615 = vmatpush2.bf16.msra.mxu0 %v1565
          %1616 = vmatprep.subr.bf16.mxu0 0
          %1617 = vmatpush2.bf16.msra.mxu0 %v1564
          %1618 = vmatprep.subr.bf16.mxu0 0
          %1619 = vmatpush2.bf16.msra.mxu0 %v1563
          %1620 = vmatprep.subr.bf16.mxu0 0
          %1621 = vmatpush2.bf16.msra.mxu0 %v1562
          %1622 = vmatprep.subr.bf16.mxu0 0
          %1623 = vmatpush2.bf16.msra.mxu0 %v1561
          %1624 = vmatprep.subr.bf16.mxu0 0
          %1625 = vmatpush2.bf16.msra.mxu0 %v1560
          %1626 = vmatprep.subr.bf16.mxu0 0
          %1627 = vmatpush2.bf16.msra.mxu0 %v1559
          %1628 = vmatprep.subr.bf16.mxu0 0
          %1629 = vmatpush2.bf16.msra.mxu0 %v1558
          %1630 = vmatprep.mubr.bf16.mxu0 %v1431
          %1631 = vmatmul.mubr.bf16.gmra.mxu0 %v1430
          %v1632 = vpop.f32.mrf.mxu0
          %v1633 = vadd.f32 0.0, %v1632
          %v1634 = vpop.f32.mrf.mxu0
          %v1635 = vpop.f32.mrf.mxu0
          %v1636 = vadd.f32 0.0, %v1635
          %v1637 = vpop.f32.mrf.mxu0
          %1638 = vmatprep.mubr.bf16.mxu0 %v1434
          %1639 = vmatmul.mubr.bf16.gmra.mxu0 %v1433
          %v1640 = vpop.f32.mrf.mxu0
          %v1641 = vadd.f32 0.0, %v1640
          %v1642 = vpop.f32.mrf.mxu0
          %v1643 = vpop.f32.mrf.mxu0
          %v1644 = vadd.f32 0.0, %v1643
          %v1645 = vpop.f32.mrf.mxu0
          %1646 = vmatprep.mubr.bf16.mxu0 %v1437
          %1647 = vmatmul.mubr.bf16.gmra.mxu0 %v1436
          %v1648 = vpop.f32.mrf.mxu0
          %v1649 = vadd.f32 0.0, %v1648
          %v1650 = vpop.f32.mrf.mxu0
          %v1651 = vpop.f32.mrf.mxu0
          %v1652 = vadd.f32 0.0, %v1651
          %v1653 = vpop.f32.mrf.mxu0
          %1654 = vmatprep.mubr.bf16.mxu0 %v1440
          %1655 = vmatmul.mubr.bf16.gmra.mxu0 %v1439
          %v1656 = vpop.f32.mrf.mxu0
          %v1657 = vadd.f32 0.0, %v1656
          %v1658 = vpop.f32.mrf.mxu0
          %v1659 = vpop.f32.mrf.mxu0
          %v1660 = vadd.f32 0.0, %v1659
          %v1661 = vpop.f32.mrf.mxu0
          %1662 = vmatprep.mubr.bf16.mxu0 %v1443
          %1663 = vmatmul.mubr.bf16.gmra.mxu0 %v1442
          %v1664 = vpop.f32.mrf.mxu0
          %v1665 = vadd.f32 0.0, %v1664
          %v1666 = vpop.f32.mrf.mxu0
          %v1667 = vpop.f32.mrf.mxu0
          %v1668 = vadd.f32 0.0, %v1667
          %v1669 = vpop.f32.mrf.mxu0
          %1670 = vmatprep.mubr.bf16.mxu0 %v1446
          %1671 = vmatmul.mubr.bf16.gmra.mxu0 %v1445
          %v1672 = vpop.f32.mrf.mxu0
          %v1673 = vadd.f32 0.0, %v1672
          %v1674 = vpop.f32.mrf.mxu0
          %v1675 = vpop.f32.mrf.mxu0
          %v1676 = vadd.f32 0.0, %v1675
          %v1677 = vpop.f32.mrf.mxu0
          %1678 = vmatprep.mubr.bf16.mxu0 %v1449
          %1679 = vmatmul.mubr.bf16.gmra.mxu0 %v1448
          %v1680 = vpop.f32.mrf.mxu0
          %v1681 = vadd.f32 0.0, %v1680
          %v1682 = vpop.f32.mrf.mxu0
          %v1683 = vpop.f32.mrf.mxu0
          %v1684 = vadd.f32 0.0, %v1683
          %v1685 = vpop.f32.mrf.mxu0
          %1686 = vmatprep.mubr.bf16.mxu0 %v1452
          %1687 = vmatmul.mubr.bf16.gmra.mxu0 %v1451
          %v1688 = vpop.f32.mrf.mxu0
          %v1689 = vadd.f32 0.0, %v1688
          %v1690 = vpop.f32.mrf.mxu0
          %v1691 = vpop.f32.mrf.mxu0
          %v1692 = vadd.f32 0.0, %v1691
          %v1693 = vpop.f32.mrf.mxu0
          %1694 = vdwg.mxu0
          %1695 = vmatprep.subr.bf16.mxu0 0
          %1696 = vmatpush1.bf16.msra.mxu0 %v1573
          %1697 = vmatprep.subr.bf16.mxu0 0
          %1698 = vmatpush1.bf16.msra.mxu0 %v1572
          %1699 = vmatprep.subr.bf16.mxu0 0
          %1700 = vmatpush1.bf16.msra.mxu0 %v1571
          %1701 = vmatprep.subr.bf16.mxu0 0
          %1702 = vmatpush1.bf16.msra.mxu0 %v1570
          %1703 = vmatprep.subr.bf16.mxu0 0
          %1704 = vmatpush1.bf16.msra.mxu0 %v1569
          %1705 = vmatprep.subr.bf16.mxu0 0
          %1706 = vmatpush1.bf16.msra.mxu0 %v1568
          %1707 = vmatprep.subr.bf16.mxu0 0
          %1708 = vmatpush1.bf16.msra.mxu0 %v1567
          %1709 = vmatprep.subr.bf16.mxu0 0
          %1710 = vmatpush1.bf16.msra.mxu0 %v1566
          %1711 = vmatprep.subr.bf16.mxu0 0
          %1712 = vmatpush2.bf16.msra.mxu0 0
          %1713 = vmatprep.subr.bf16.mxu0 0
          %1714 = vmatpush2.bf16.msra.mxu0 0
          %1715 = vmatprep.subr.bf16.mxu0 0
          %1716 = vmatpush2.bf16.msra.mxu0 0
          %1717 = vmatprep.subr.bf16.mxu0 0
          %1718 = vmatpush2.bf16.msra.mxu0 0
          %1719 = vmatprep.subr.bf16.mxu0 0
          %1720 = vmatpush2.bf16.msra.mxu0 0
          %1721 = vmatprep.subr.bf16.mxu0 0
          %1722 = vmatpush2.bf16.msra.mxu0 0
          %1723 = vmatprep.subr.bf16.mxu0 0
          %1724 = vmatpush2.bf16.msra.mxu0 0
          %1725 = vmatprep.subr.bf16.mxu0 0
          %1726 = vmatpush2.bf16.msra.mxu0 0
          %1727 = vmatprep.mubr.bf16.mxu0 0
          %1728 = vmatmul.mubr.bf16.gmra.mxu0 %v1432
          %v1729 = vpop.f32.mrf.mxu0
          %v1730 = vadd.f32 %v1633, %v1729
          %v1731 = vpop.f32.mrf.mxu0
          %v1732 = vpop.f32.mrf.mxu0
          %v1733 = vadd.f32 %v1636, %v1732
          %v1734 = vpop.f32.mrf.mxu0
          %1735 = vmatprep.mubr.bf16.mxu0 0
          %1736 = vmatmul.mubr.bf16.gmra.mxu0 %v1435
          %v1737 = vpop.f32.mrf.mxu0
          %v1738 = vadd.f32 %v1641, %v1737
          %v1739 = vpop.f32.mrf.mxu0
          %v1740 = vpop.f32.mrf.mxu0
          %v1741 = vadd.f32 %v1644, %v1740
          %v1742 = vpop.f32.mrf.mxu0
          %1743 = vmatprep.mubr.bf16.mxu0 0
          %1744 = vmatmul.mubr.bf16.gmra.mxu0 %v1438
          %v1745 = vpop.f32.mrf.mxu0
          %v1746 = vadd.f32 %v1649, %v1745
          %v1747 = vpop.f32.mrf.mxu0
          %v1748 = vpop.f32.mrf.mxu0
          %v1749 = vadd.f32 %v1652, %v1748
          %v1750 = vpop.f32.mrf.mxu0
          %1751 = vmatprep.mubr.bf16.mxu0 0
          %1752 = vmatmul.mubr.bf16.gmra.mxu0 %v1441
          %v1753 = vpop.f32.mrf.mxu0
          %v1754 = vadd.f32 %v1657, %v1753
          %v1755 = vpop.f32.mrf.mxu0
          %v1756 = vpop.f32.mrf.mxu0
          %v1757 = vadd.f32 %v1660, %v1756
          %v1758 = vpop.f32.mrf.mxu0
          %1759 = vmatprep.mubr.bf16.mxu0 0
          %1760 = vmatmul.mubr.bf16.gmra.mxu0 %v1444
          %v1761 = vpop.f32.mrf.mxu0
          %v1762 = vadd.f32 %v1665, %v1761
          %v1763 = vpop.f32.mrf.mxu0
          %v1764 = vpop.f32.mrf.mxu0
          %v1765 = vadd.f32 %v1668, %v1764
          %v1766 = vpop.f32.mrf.mxu0
          %1767 = vmatprep.mubr.bf16.mxu0 0
          %1768 = vmatmul.mubr.bf16.gmra.mxu0 %v1447
          %v1769 = vpop.f32.mrf.mxu0
          %v1770 = vadd.f32 %v1673, %v1769
          %v1771 = vpop.f32.mrf.mxu0
          %v1772 = vpop.f32.mrf.mxu0
          %v1773 = vadd.f32 %v1676, %v1772
          %v1774 = vpop.f32.mrf.mxu0
          %1775 = vmatprep.mubr.bf16.mxu0 0
          %1776 = vmatmul.mubr.bf16.gmra.mxu0 %v1450
          %v1777 = vpop.f32.mrf.mxu0
          %v1778 = vadd.f32 %v1681, %v1777
          %v1779 = vpop.f32.mrf.mxu0
          %v1780 = vpop.f32.mrf.mxu0
          %v1781 = vadd.f32 %v1684, %v1780
          %v1782 = vpop.f32.mrf.mxu0
          %1783 = vmatprep.mubr.bf16.mxu0 0
          %1784 = vmatmul.mubr.bf16.gmra.mxu0 %v1453
          %v1785 = vpop.f32.mrf.mxu0
          %v1786 = vadd.f32 %v1689, %v1785
          %v1787 = vpop.f32.mrf.mxu0
          %v1788 = vpop.f32.mrf.mxu0
          %v1789 = vadd.f32 %v1692, %v1788
          %v1790 = vpop.f32.mrf.mxu0
          %1791 = vdwg.mxu0
          %v1792 = vld [vmem:[#allocation2] sm:$0xff]
          %v1793 = vld [vmem:[#allocation2 + $0x8] sm:$0xff]
          %v1794 = vld [vmem:[#allocation2 + $0x10] sm:$0xff]
          %v1795 = vld [vmem:[#allocation2 + $0x18] sm:$0xff]
          %v1796 = vld [vmem:[#allocation2 + $0x20] sm:$0xff]
          %v1797 = vld [vmem:[#allocation2 + $0x28] sm:$0xff]
          %v1798 = vld [vmem:[#allocation2 + $0x30] sm:$0xff]
          %v1799 = vld [vmem:[#allocation2 + $0x38] sm:$0xff]
          %v1800 = vld [vmem:[#allocation2 + $0x40] sm:$0xff]
          %v1801 = vld [vmem:[#allocation2 + $0x48] sm:$0xff]
          %v1802 = vld [vmem:[#allocation2 + $0x50] sm:$0xff]
          %v1803 = vld [vmem:[#allocation2 + $0x58] sm:$0xff]
          %v1804 = vld [vmem:[#allocation2 + $0x60] sm:$0xff]
          %v1805 = vld [vmem:[#allocation2 + $0x68] sm:$0xff]
          %v1806 = vld [vmem:[#allocation2 + $0x70] sm:$0xff]
          %v1807 = vld [vmem:[#allocation2 + $0x78] sm:$0xff]
          %v1808 = vld [vmem:[%s270] sm:$0xff]
          %v1809 = vld [vmem:[%s270 + $0x8] sm:$0xff]
          %v1810 = vld [vmem:[%s270 + $0x10] sm:$0xff]
          %v1811 = vld [vmem:[%s270 + $0x18] sm:$0xff]
          %v1812 = vld [vmem:[%s270 + $0x20] sm:$0xff]
          %v1813 = vld [vmem:[%s270 + $0x28] sm:$0xff]
          %v1814 = vld [vmem:[%s270 + $0x30] sm:$0xff]
          %v1815 = vld [vmem:[%s270 + $0x38] sm:$0xff]
          %v1816 = vld [vmem:[%s270 + $0x40] sm:$0xff]
          %v1817 = vld [vmem:[%s270 + $0x48] sm:$0xff]
          %v1818 = vld [vmem:[%s270 + $0x50] sm:$0xff]
          %v1819 = vld [vmem:[%s270 + $0x58] sm:$0xff]
          %v1820 = vld [vmem:[%s270 + $0x60] sm:$0xff]
          %v1821 = vld [vmem:[%s270 + $0x68] sm:$0xff]
          %v1822 = vld [vmem:[%s270 + $0x70] sm:$0xff]
          %v1823 = vld [vmem:[%s270 + $0x78] sm:$0xff]
          %1825 = vset.pattern.permute.xlu0 0
          %1826 = vperm.xlu0 %1825, %v1808
          %v1827 = vpop.permute.xlu0 %1826
          %1830 = vset.pattern.permute.xlu0 0
          %1831 = vperm.xlu0 %1830, %v1809
          %v1832 = vpop.permute.xlu0 %1831
          %1835 = vset.pattern.permute.xlu0 0
          %1836 = vperm.xlu0 %1835, %v1810
          %v1837 = vpop.permute.xlu0 %1836
          %1840 = vset.pattern.permute.xlu0 0
          %1841 = vperm.xlu0 %1840, %v1811
          %v1842 = vpop.permute.xlu0 %1841
          %1845 = vset.pattern.permute.xlu0 0
          %1846 = vperm.xlu0 %1845, %v1812
          %v1847 = vpop.permute.xlu0 %1846
          %1850 = vset.pattern.permute.xlu0 0
          %1851 = vperm.xlu0 %1850, %v1813
          %v1852 = vpop.permute.xlu0 %1851
          %1855 = vset.pattern.permute.xlu0 0
          %1856 = vperm.xlu0 %1855, %v1814
          %v1857 = vpop.permute.xlu0 %1856
          %1860 = vset.pattern.permute.xlu0 0
          %1861 = vperm.xlu0 %1860, %v1815
          %v1862 = vpop.permute.xlu0 %1861
          %1865 = vset.pattern.permute.xlu0 0
          %1866 = vperm.xlu0 %1865, %v1816
          %v1867 = vpop.permute.xlu0 %1866
          %1870 = vset.pattern.permute.xlu0 0
          %1871 = vperm.xlu0 %1870, %v1817
          %v1872 = vpop.permute.xlu0 %1871
          %1875 = vset.pattern.permute.xlu0 0
          %1876 = vperm.xlu0 %1875, %v1818
          %v1877 = vpop.permute.xlu0 %1876
          %1880 = vset.pattern.permute.xlu0 0
          %1881 = vperm.xlu0 %1880, %v1819
          %v1882 = vpop.permute.xlu0 %1881
          %1885 = vset.pattern.permute.xlu0 0
          %1886 = vperm.xlu0 %1885, %v1820
          %v1887 = vpop.permute.xlu0 %1886
          %1890 = vset.pattern.permute.xlu0 0
          %1891 = vperm.xlu0 %1890, %v1821
          %v1892 = vpop.permute.xlu0 %1891
          %1895 = vset.pattern.permute.xlu0 0
          %1896 = vperm.xlu0 %1895, %v1822
          %v1897 = vpop.permute.xlu0 %1896
          %1900 = vset.pattern.permute.xlu0 0
          %1901 = vperm.xlu0 %1900, %v1823
          %v1902 = vpop.permute.xlu0 %1901
          %v1904 = vmul.f32 %v1827, %v1730
          %v1905 = vmul.f32 %v1832, %v1733
          %v1906 = vmul.f32 %v1837, %v1738
          %v1907 = vmul.f32 %v1842, %v1741
          %v1908 = vmul.f32 %v1847, %v1746
          %v1909 = vmul.f32 %v1852, %v1749
          %v1910 = vmul.f32 %v1857, %v1754
          %v1911 = vmul.f32 %v1862, %v1757
          %v1912 = vmul.f32 %v1867, %v1762
          %v1913 = vmul.f32 %v1872, %v1765
          %v1914 = vmul.f32 %v1877, %v1770
          %v1915 = vmul.f32 %v1882, %v1773
          %v1916 = vmul.f32 %v1887, %v1778
          %v1917 = vmul.f32 %v1892, %v1781
          %v1918 = vmul.f32 %v1897, %v1786
          %v1919 = vmul.f32 %v1902, %v1789
          %v1920 = vadd.f32 %v1792, %v1904
          %v1921 = vadd.f32 %v1793, %v1905
          %v1922 = vadd.f32 %v1794, %v1906
          %v1923 = vadd.f32 %v1795, %v1907
          %v1924 = vadd.f32 %v1796, %v1908
          %v1925 = vadd.f32 %v1797, %v1909
          %v1926 = vadd.f32 %v1798, %v1910
          %v1927 = vadd.f32 %v1799, %v1911
          %v1928 = vadd.f32 %v1800, %v1912
          %v1929 = vadd.f32 %v1801, %v1913
          %v1930 = vadd.f32 %v1802, %v1914
          %v1931 = vadd.f32 %v1803, %v1915
          %v1932 = vadd.f32 %v1804, %v1916
          %v1933 = vadd.f32 %v1805, %v1917
          %v1934 = vadd.f32 %v1806, %v1918
          %v1935 = vadd.f32 %v1807, %v1919
          %1936 = vst [vmem:[#allocation2] sm:$0xff] %v1920
          %1937 = vst [vmem:[#allocation2 + $0x8] sm:$0xff] %v1921
          %1938 = vst [vmem:[#allocation2 + $0x10] sm:$0xff] %v1922
          %1939 = vst [vmem:[#allocation2 + $0x18] sm:$0xff] %v1923
          %1940 = vst [vmem:[#allocation2 + $0x20] sm:$0xff] %v1924
          %1941 = vst [vmem:[#allocation2 + $0x28] sm:$0xff] %v1925
          %1942 = vst [vmem:[#allocation2 + $0x30] sm:$0xff] %v1926
          %1943 = vst [vmem:[#allocation2 + $0x38] sm:$0xff] %v1927
          %1944 = vst [vmem:[#allocation2 + $0x40] sm:$0xff] %v1928
          %1945 = vst [vmem:[#allocation2 + $0x48] sm:$0xff] %v1929
          %1946 = vst [vmem:[#allocation2 + $0x50] sm:$0xff] %v1930
          %1947 = vst [vmem:[#allocation2 + $0x58] sm:$0xff] %v1931
          %1948 = vst [vmem:[#allocation2 + $0x60] sm:$0xff] %v1932
          %1949 = vst [vmem:[#allocation2 + $0x68] sm:$0xff] %v1933
          %1950 = vst [vmem:[#allocation2 + $0x70] sm:$0xff] %v1934
          %1951 = vst [vmem:[#allocation2 + $0x78] sm:$0xff] %v1935
        $region48: #{tpu_custom_call.1} parent=35 // pred_fallthru
          _
        %p1952 = scmp.eq.s32.totalorder %s36, 4
        // Predicated region
        $region49: #{tpu_custom_call.1} parent=35 // pred_check
          %p1953 = pneg %p1952
        $region50: #{tpu_custom_call.1} parent=35 // pred_check_branch
          %1955 = sbr.rel (%p1953) target = $region52
        $region51: #{tpu_custom_call.1} parent=35 // pred_region
          %v1956 = vld [vmem:[#allocation2] sm:$0xff]
          %v1957 = vld [vmem:[#allocation2 + $0x8] sm:$0xff]
          %v1958 = vld [vmem:[#allocation2 + $0x10] sm:$0xff]
          %v1959 = vld [vmem:[#allocation2 + $0x18] sm:$0xff]
          %v1960 = vld [vmem:[#allocation2 + $0x20] sm:$0xff]
          %v1961 = vld [vmem:[#allocation2 + $0x28] sm:$0xff]
          %v1962 = vld [vmem:[#allocation2 + $0x30] sm:$0xff]
          %v1963 = vld [vmem:[#allocation2 + $0x38] sm:$0xff]
          %v1964 = vld [vmem:[#allocation2 + $0x40] sm:$0xff]
          %v1965 = vld [vmem:[#allocation2 + $0x48] sm:$0xff]
          %v1966 = vld [vmem:[#allocation2 + $0x50] sm:$0xff]
          %v1967 = vld [vmem:[#allocation2 + $0x58] sm:$0xff]
          %v1968 = vld [vmem:[#allocation2 + $0x60] sm:$0xff]
          %v1969 = vld [vmem:[#allocation2 + $0x68] sm:$0xff]
          %v1970 = vld [vmem:[#allocation2 + $0x70] sm:$0xff]
          %v1971 = vld [vmem:[#allocation2 + $0x78] sm:$0xff]
          %v1972 = vpack.c.bf16 %v1957, %v1956
          %v1973 = vpack.c.bf16 %v1959, %v1958
          %v1974 = vpack.c.bf16 %v1961, %v1960
          %v1975 = vpack.c.bf16 %v1963, %v1962
          %v1976 = vpack.c.bf16 %v1965, %v1964
          %v1977 = vpack.c.bf16 %v1967, %v1966
          %v1978 = vpack.c.bf16 %v1969, %v1968
          %v1979 = vpack.c.bf16 %v1971, %v1970
          %v1988 = vunpack.c.l.b16 %v1972
          %v1989 = vunpack.c.h.b16 %v1972
          %v1990 = vunpack.c.l.b16 %v1973
          %v1991 = vunpack.c.h.b16 %v1973
          %v1992 = vunpack.c.l.b16 %v1974
          %v1993 = vunpack.c.h.b16 %v1974
          %v1994 = vunpack.c.l.b16 %v1975
          %v1995 = vunpack.c.h.b16 %v1975
          %v1996 = vunpack.c.l.b16 %v1976
          %v1997 = vunpack.c.h.b16 %v1976
          %v1998 = vunpack.c.l.b16 %v1977
          %v1999 = vunpack.c.h.b16 %v1977
          %v2000 = vunpack.c.l.b16 %v1978
          %v2001 = vunpack.c.h.b16 %v1978
          %v2002 = vunpack.c.l.b16 %v1979
          %v2003 = vunpack.c.h.b16 %v1979
          %v2004 = vpack.c.b16 %v1988, %v1988
          %v2005 = vpack.c.b16 %v1989, %v1989
          %v2006 = vpack.c.b16 %v1990, %v1990
          %v2007 = vpack.c.b16 %v1991, %v1991
          %v2008 = vpack.c.b16 %v1992, %v1992
          %v2009 = vpack.c.b16 %v1993, %v1993
          %v2010 = vpack.c.b16 %v1994, %v1994
          %v2011 = vpack.c.b16 %v1995, %v1995
          %v2012 = vpack.c.b16 %v1996, %v1996
          %v2013 = vpack.c.b16 %v1997, %v1997
          %v2014 = vpack.c.b16 %v1998, %v1998
          %v2015 = vpack.c.b16 %v1999, %v1999
          %v2016 = vpack.c.b16 %v2000, %v2000
          %v2017 = vpack.c.b16 %v2001, %v2001
          %v2018 = vpack.c.b16 %v2002, %v2002
          %v2019 = vpack.c.b16 %v2003, %v2003
          %2036 = vst [vmem:[%s255] sm:$0xf] %v2004
          %2037 = vst [vmem:[%s255 + $0x4] sm:$0xf] %v2005
          %2038 = vst [vmem:[%s255 + $0x8] sm:$0xf] %v2006
          %2039 = vst [vmem:[%s255 + $0xc] sm:$0xf] %v2007
          %2040 = vst [vmem:[%s255 + $0x10] sm:$0xf] %v2008
          %2041 = vst [vmem:[%s255 + $0x14] sm:$0xf] %v2009
          %2042 = vst [vmem:[%s255 + $0x18] sm:$0xf] %v2010
          %2043 = vst [vmem:[%s255 + $0x1c] sm:$0xf] %v2011
          %2044 = vst [vmem:[%s255 + $0x20] sm:$0xf] %v2012
          %2045 = vst [vmem:[%s255 + $0x24] sm:$0xf] %v2013
          %2046 = vst [vmem:[%s255 + $0x28] sm:$0xf] %v2014
          %2047 = vst [vmem:[%s255 + $0x2c] sm:$0xf] %v2015
          %2048 = vst [vmem:[%s255 + $0x30] sm:$0xf] %v2016
          %2049 = vst [vmem:[%s255 + $0x34] sm:$0xf] %v2017
          %2050 = vst [vmem:[%s255 + $0x38] sm:$0xf] %v2018
          %2051 = vst [vmem:[%s255 + $0x3c] sm:$0xf] %v2019
        $region52: #{tpu_custom_call.1} parent=35 // pred_fallthru
          _
        %s2052 = sand.u32 %s147, 1
        %s2053 = scalar_lea.sflag [#allocation8], %s2052
        %s2054 = sand.u32 %s147, 1
        %s2055 = smul.addr %s2054, 64
        %s2056 = scalar_lea.vmem [#allocation9], %s2055
        // Predicated region
        $region53: #{tpu_custom_call.1} parent=35 // pred_check
          %p2057 = pneg %p157
        $region54: #{tpu_custom_call.1} parent=35 // pred_check_branch
          %2059 = sbr.rel (%p2057) target = $region56
        $region55: #{tpu_custom_call.1} parent=35 // pred_region
          %s2060 = smul.u32 16, %s35
          %s2062 = ssub.s32 1024, 1024
          %2063 = vsyncadd %s2053, %s2062
          %s2064 = smul.addr %s2060, 64
          %s2065 = scalar_lea.hbm %s6, %s2064
          %s2066 = sshll.u32 %s2056, 4
          %s2067 = int_to_ptr.vmem [resolvable:$true] %s2066
          %2072 = dma.vmem_to_hbm [thread:$0]  %s2067, 1024, %s2065, %s2053, 64, 64, 4
        $region56: #{tpu_custom_call.1} parent=35 // pred_fallthru
          _
      $region36: #{tpu_custom_call.1} parent=5 // pred_fallthru
        _
      %p2073 = scmp.le.s32.totalorder 2, %s26
      // Predicated region
      $region57: #{tpu_custom_call.1} parent=5 // pred_check
        %p2074 = pneg %p2073
      $region58: #{tpu_custom_call.1} parent=5 // pred_check_branch
        %2076 = sbr.rel (%p2074) target = $region60
      $region59: #{tpu_custom_call.1} parent=5 // pred_region
        %s2077 = ssub.s32 %s26, 2
        // Predicated region
        $region61: #{tpu_custom_call.1} parent=59 // pred_check
          %p2078 = pneg %p163
        $region62: #{tpu_custom_call.1} parent=59 // pred_check_branch
          %2080 = sbr.rel (%p2078) target = $region64
        $region63: #{tpu_custom_call.1} parent=59 // pred_region
          %s2081 = sand.u32 %s148, 1
          %s2082 = scalar_lea.sflag [#allocation8], %s2081
          %s2083 = sand.u32 %s148, 1
          %s2084 = smul.addr %s2083, 64
          %s2085 = scalar_lea.vmem [#allocation9], %s2084
          %2086 = dma.done %s2082, 1024
        $region64: #{tpu_custom_call.1} parent=59 // pred_fallthru
          _
      $region60: #{tpu_custom_call.1} parent=5 // pred_fallthru
        _
    $region6: #{tpu_custom_call.1} parent=1 // loop_footer
      %s30 = sadd.s32 1, %s26
    $region7: #{tpu_custom_call.1} parent=1 // loop_footer_branch
      %25 = sbr.rel target = $region3
    $region8: #{tpu_custom_call.1} parent=1 // loop_exit
      _
    %2087 = vsyncpa [#allocation7], 1
    %s2088 = scalar_lea.sflag [#allocation7], 1
    %2089 = vsyncpa %s2088, 1
    %2090 = vsyncpa [#allocation8], 1
    %s2091 = scalar_lea.sflag [#allocation8], 1
    %2092 = vsyncpa %s2091, 1

</llo_original>
